<compile_context>
chip_gen: v7x
topology: tpu7x:2x2x1
jax: 0.10.0
libtpu: 0.0.40
codegen_flags: <defaults>
</compile_context>

<pallas_src>
import functools

import jax
import jax.numpy as jnp
from jax.experimental import pallas as pl
from jax.experimental.pallas import tpu as pltpu

# MXU input / intermediate-activation dtype (accumulation is always f32).
MXU_DTYPE = jnp.bfloat16
BN_EPS = 1e-5


# ----------------------------- Pallas kernels ------------------------------

def _banded_conv(x, band_ref, h_img):
    """3x3 'same' conv on a slab of TB stacked images.

    x:        (TB*h_img, W*Cin) bf16 rows, lanes = (w, ci)
    band_ref: (3, W*Cin, W*Cout) banded weights; kx taps + width padding are
              folded into the bands, the 3 ky taps become 3 accumulated dots
              with XLU row-rolls.  Rows of different images are decoupled by
              an iota row mask (also realizes the height zero-padding).
    """
    rows = x.shape[0]
    mid = jnp.dot(x, band_ref[1], preferred_element_type=jnp.float32)  # ky=1
    up = jnp.dot(x, band_ref[0], preferred_element_type=jnp.float32)   # r -> r+1
    dn = jnp.dot(x, band_ref[2], preferred_element_type=jnp.float32)   # r -> r-1

    row_in_img = jax.lax.broadcasted_iota(jnp.int32, mid.shape, 0) % h_img
    up_sh = pltpu.roll(up, shift=1, axis=0)            # row o gets up[o-1]
    dn_sh = pltpu.roll(dn, shift=rows - 1, axis=0)     # row o gets dn[o+1]
    zero = jnp.zeros_like(mid)
    return (mid
            + jnp.where(row_in_img == 0, zero, up_sh)
            + jnp.where(row_in_img == h_img - 1, zero, dn_sh))


def _upconv_kernel(x_ref, w_ref, b_ref, o_ref):
    """ConvTranspose2d(k=2, s=2) for TB images as one lane-dense matmul.

    x_ref: (TB*H, W*Cin)       lanes = (w, ci)
    w_ref: (W*Cin, 4*W*Cup)    block-diag, columns ordered (dy, 2w+dx, co)
    b_ref: (1, 4*W*Cup)        bias tiled over (dy, w', co)
    o_ref: (TB*H, 4*W*Cup)     bf16; HBM reshape to (N*2H, 2W*Cup) is free.
    """
    y = jnp.dot(x_ref[...], w_ref[...], preferred_element_type=jnp.float32)
    o_ref[...] = (y + b_ref[...]).astype(o_ref.dtype)


def _conv_concat_stats_kernel(xa_ref, xb_ref, ba_ref, bb_ref,
                              o_ref, s_ref, q_ref, *, h_img):
    """conv1: channel-concat realized as a K-split (two accumulated banded
    matmuls) + per-grid-step BatchNorm statistics partials (f32)."""
    y = (_banded_conv(xa_ref[...], ba_ref, h_img)
         + _banded_conv(xb_ref[...], bb_ref, h_img))
    o_ref[...] = y.astype(o_ref.dtype)
    s_ref[0] = jnp.sum(y, axis=0, keepdims=True)
    q_ref[0] = jnp.sum(y * y, axis=0, keepdims=True)


def _bn_relu_conv_stats_kernel(x_ref, sc_ref, sh_ref, band_ref,
                               o_ref, s_ref, q_ref, *, h_img):
    """conv2: BN(batch stats)+ReLU of layer 1 fused in front of the banded
    conv (f32 math, bf16 only at the MXU), + stats partials."""
    xn = jnp.maximum(
        x_ref[...].astype(jnp.float32) * sc_ref[...] + sh_ref[...], 0.0)
    y = _banded_conv(xn.astype(MXU_DTYPE), band_ref, h_img)
    o_ref[...] = y.astype(o_ref.dtype)
    s_ref[0] = jnp.sum(y, axis=0, keepdims=True)
    q_ref[0] = jnp.sum(y * y, axis=0, keepdims=True)


# --------------------------- pallas_call wrappers ---------------------------

def _upconv_call(x2d, wmat, bias_vec, rb):
    rows, wc = x2d.shape
    k4 = wmat.shape[1]
    grid = rows // rb
    return pl.pallas_call(
        _upconv_kernel,
        out_shape=jax.ShapeDtypeStruct((rows, k4), MXU_DTYPE),
        grid=(grid,),
        in_specs=[pl.BlockSpec((rb, wc), lambda i: (i, 0)),
                  pl.BlockSpec(wmat.shape, lambda i: (0, 0)),
                  pl.BlockSpec((1, k4), lambda i: (0, 0))],
        out_specs=pl.BlockSpec((rb, k4), lambda i: (i, 0)),
        compiler_params=pltpu.CompilerParams(
            dimension_semantics=("parallel",)),
    )(x2d, wmat, bias_vec)


def _conv1_call(xa2d, xb2d, band_a, band_b, rb, h_img):
    rows, wca = xa2d.shape
    wcb = xb2d.shape[1]
    wco = band_a.shape[2]
    grid = rows // rb
    return pl.pallas_call(
        functools.partial(_conv_concat_stats_kernel, h_img=h_img),
        out_shape=(jax.ShapeDtypeStruct((rows, wco), MXU_DTYPE),
                   jax.ShapeDtypeStruct((grid, 1, wco), jnp.float32),
                   jax.ShapeDtypeStruct((grid, 1, wco), jnp.float32)),
        grid=(grid,),
        in_specs=[pl.BlockSpec((rb, wca), lambda i: (i, 0)),
                  pl.BlockSpec((rb, wcb), lambda i: (i, 0)),
                  pl.BlockSpec(band_a.shape, lambda i: (0, 0, 0)),
                  pl.BlockSpec(band_b.shape, lambda i: (0, 0, 0))],
        out_specs=(pl.BlockSpec((rb, wco), lambda i: (i, 0)),
                   pl.BlockSpec((1, 1, wco), lambda i: (i, 0, 0)),
                   pl.BlockSpec((1, 1, wco), lambda i: (i, 0, 0))),
        compiler_params=pltpu.CompilerParams(
            dimension_semantics=("parallel",)),
    )(xa2d, xb2d, band_a, band_b)


def _conv2_call(x2d, scale_vec, shift_vec, band, rb, h_img):
    rows, wci = x2d.shape
    wco = band.shape[2]
    grid = rows // rb
    return pl.pallas_call(
        functools.partial(_bn_relu_conv_stats_kernel, h_img=h_img),
        out_shape=(jax.ShapeDtypeStruct((rows, wco), MXU_DTYPE),
                   jax.ShapeDtypeStruct((grid, 1, wco), jnp.float32),
                   jax.ShapeDtypeStruct((grid, 1, wco), jnp.float32)),
        grid=(grid,),
        in_specs=[pl.BlockSpec((rb, wci), lambda i: (i, 0)),
                  pl.BlockSpec((1, wci), lambda i: (0, 0)),
                  pl.BlockSpec((1, wci), lambda i: (0, 0)),
                  pl.BlockSpec(band.shape, lambda i: (0, 0, 0))],
        out_specs=(pl.BlockSpec((rb, wco), lambda i: (i, 0)),
                   pl.BlockSpec((1, 1, wco), lambda i: (i, 0, 0)),
                   pl.BlockSpec((1, 1, wco), lambda i: (i, 0, 0))),
        compiler_params=pltpu.CompilerParams(
            dimension_semantics=("parallel",)),
    )(x2d, scale_vec, shift_vec, band)


# ----------------------- weight / stat transformations ----------------------

def _conv3x3_bands(w, width):
    """(Cout, Cin, 3, 3) torch weights -> (3, width*Cin, width*Cout) banded
    matrices (kx taps and width zero-padding baked in).  Tiny; const-folded."""
    wt = jnp.transpose(w, (2, 3, 1, 0)).astype(jnp.float32)  # (ky, kx, Cin, Cout)
    bands = []
    for ky in range(3):
        b = jnp.zeros((width * wt.shape[2], width * wt.shape[3]), jnp.float32)
        for kx in range(3):
            b = b + jnp.kron(jnp.eye(width, k=1 - kx, dtype=jnp.float32),
                             wt[ky, kx])
        bands.append(b)
    return jnp.stack(bands).astype(MXU_DTYPE)


def _upconv_matrix(w_up, width):
    """(Cin, Cup, 2, 2) torch ConvTranspose2d weights -> (width*Cin,
    4*width*Cup) matrix; column order (dy, 2w+dx, co) makes the stride-2 pixel
    interleave of the output a free (row-major metadata) reshape."""
    cin, cup = w_up.shape[0], w_up.shape[1]
    eye = jnp.eye(width, dtype=jnp.float32)
    blocks = []
    for dy in range(2):
        a = jnp.transpose(w_up[:, :, dy, :], (0, 2, 1)).reshape(cin, 2 * cup)
        blocks.append(jnp.kron(eye, a.astype(jnp.float32)))
    return jnp.concatenate(blocks, axis=1).astype(MXU_DTYPE)


def _bn_affine(psum, psq, gamma, beta, count, width, cout):
    """Per-grid-step (grid, 1, width*cout) sum / sum-of-squares partials ->
    per-channel train-mode BN affine (scale, shift); f32 throughout."""
    s = psum.reshape(-1, width, cout).sum(axis=(0, 1))
    q = psq.reshape(-1, width, cout).sum(axis=(0, 1))
    mean = s / count
    var = jnp.maximum(q / count - mean * mean, 0.0)   # biased, train-mode
    scale = gamma * jax.lax.rsqrt(var + BN_EPS)
    shift = beta - mean * scale
    return scale, shift


def _tile_lanes(vec, width):
    """Per-channel (C,) vector -> (1, width*C) lane layout (w, c)."""
    return jnp.tile(vec, width).reshape(1, -1)


def _pick_tb(n, rows_per_img, target_rows=256):
    """Largest divisor of n with tb*rows_per_img <= target_rows (>= 1)."""
    best = 1
    for cand in range(1, n + 1):
        if n % cand == 0 and (cand * rows_per_img <= target_rows or cand == 1):
            best = cand
    return best


# ------------------------------ forward pass --------------------------------

def upconv_forward(params, x1, x2):
    n, cin, h, w = x1.shape
    cup = cin // 2
    cout = params["w1"].shape[0]
    h2, w2 = 2 * h, 2 * w
    tb = _pick_tb(n, h2)        # images per grid step (M rows per MXU dot)

    # -- ConvTranspose2d(k=2, s=2): NCHW -> flat NHWC rows (module boundary) --
    x1_rows = jnp.transpose(x1, (0, 2, 3, 1)).reshape(n * h, w * cin)
    up_mat = _upconv_matrix(params["w_up"], w)                  # (W*Cin, 4W*Cup)
    up_bias = jnp.tile(params["b_up"], 4 * w).reshape(1, 4 * w * cup)
    up_bias = up_bias.astype(jnp.float32)
    y_up = _upconv_call(x1_rows.astype(MXU_DTYPE), up_mat, up_bias, tb * h)
    # Free (metadata-only) HBM reshape: (N*H, 4W*Cup) -> (N*2H, 2W*Cup).
    x1u = y_up.reshape(n * h2, w2 * cup)

    # -- crop the skip connection (exact reference slicing; diff must be even,
    #    same as the PyTorch module which would otherwise fail at the concat) -
    diff_y = x2.shape[2] - h2
    diff_x = x2.shape[3] - w2
    x2c = x2[:, :, diff_y // 2: x2.shape[2] - diff_y // 2,
                   diff_x // 2: x2.shape[3] - diff_x // 2]
    c2 = x2c.shape[1]
    x2_rows = jnp.transpose(x2c, (0, 2, 3, 1)).reshape(n * h2, w2 * c2)
    x2_rows = x2_rows.astype(MXU_DTYPE)

    # -- conv1: torch.cat([x2, x1], dim=1) realized as a K-split over the two
    #    sources (skip channels first), stats fused into the kernel -----------
    band1_skip = _conv3x3_bands(params["w1"][:, :c2], w2)
    band1_up = _conv3x3_bands(params["w1"][:, c2:], w2)
    y1, s1, q1 = _conv1_call(x2_rows, x1u, band1_skip, band1_up, tb * h2, h2)
    sc1, sh1 = _bn_affine(s1, q1, params["g1"], params["bt1"],
                          n * h2 * w2, w2, cout)

    # -- conv2: BN1+ReLU fused in front of the banded conv, stats fused -------
    band2 = _conv3x3_bands(params["w2"], w2)
    y2, s2, q2 = _conv2_call(y1, _tile_lanes(sc1, w2), _tile_lanes(sh1, w2),
                             band2, tb * h2, h2)
    sc2, sh2 = _bn_affine(s2, q2, params["g2"], params["bt2"],
                          n * h2 * w2, w2, cout)

    # -- final BN2+ReLU in plain jnp so XLA fuses it with the NHWC->NCHW
    #    transpose at the module boundary (no extra HBM round trip) -----------
    out = jnp.maximum(
        y2.astype(jnp.float32).reshape(n, h2, w2, cout) * sc2 + sh2, 0.0)
    return out.transpose(0, 3, 1, 2)


def init_params(key, in_channels, out_channels):
    cup = in_channels // 2
    ks = jax.random.split(key, 8)
    f32 = jnp.float32
    return {
        "w_up": 0.1 * jax.random.normal(ks[0], (in_channels, cup, 2, 2), f32),
        "b_up": 0.1 * jax.random.normal(ks[1], (cup,), f32),
        "w1":   0.1 * jax.random.normal(ks[2], (out_channels, in_channels, 3, 3), f32),
        "g1":   1.0 + 0.1 * jax.random.normal(ks[3], (out_channels,), f32),
        "bt1":  0.1 * jax.random.normal(ks[4], (out_channels,), f32),
        "w2":   0.1 * jax.random.normal(ks[5], (out_channels, out_channels, 3, 3), f32),
        "g2":   1.0 + 0.1 * jax.random.normal(ks[6], (out_channels,), f32),
        "bt2":  0.1 * jax.random.normal(ks[7], (out_channels,), f32),
    }


if __name__ == "__main__":
    key = jax.random.PRNGKey(0)
    kp, k1, k2 = jax.random.split(key, 3)

    in_channels, out_channels = 8, 8
    N, H, W = 2, 8, 8                      # x1 spatial; x2 is 2x larger

    params = init_params(kp, in_channels, out_channels)
    x1 = jax.random.normal(k1, (N, in_channels, H, W), jnp.float32)
    x2 = jax.random.normal(k2, (N, in_channels // 2, 2 * H, 2 * W), jnp.float32)

    fwd = jax.jit(functools.partial(upconv_forward, params))
    out = fwd(x1, x2)
    jax.block_until_ready(out)

    assert out.shape == (N, out_channels, 2 * H, 2 * W), out.shape
    assert out.dtype == jnp.float32
    assert bool(jnp.all(jnp.isfinite(out)))
    print("KERNEL_OK")
</pallas_src>

<mosaic_0001>
module attributes {stable_mosaic.version = 11 : i64} {
  func.func @_upconv_kernel(%arg0: i32, %arg1: memref<16x64xbf16, #tpu.memory_space<vmem>>, %arg2: memref<64x128xbf16, #tpu.memory_space<vmem>>, %arg3: memref<1x128xf32, #tpu.memory_space<vmem>>, %arg4: memref<16x128xbf16, #tpu.memory_space<vmem>>) attributes {dimension_semantics = [#tpu.dimension_semantics<parallel>], iteration_bounds = array<i64: 1>, scalar_prefetch = 0 : i64, scratch_operands = 0 : i64, tpu.core_type = #tpu.core_type<tc>, window_params = [{transform_indices = @transform_0, window_bounds = array<i64: 16, 64>}, {pipeline_mode = #tpu.pipeline_mode<synchronous>, transform_indices = @transform_1, window_bounds = array<i64: 64, 128>}, {pipeline_mode = #tpu.pipeline_mode<synchronous>, transform_indices = @transform_2, window_bounds = array<i64: 1, 128>}, {transform_indices = @transform_3, window_bounds = array<i64: 16, 128>}]} {
    %c0 = arith.constant 0 : index
    %c0_0 = arith.constant 0 : index
    %0 = vector.load %arg1[%c0, %c0_0] : memref<16x64xbf16, #tpu.memory_space<vmem>>, vector<16x64xbf16>
    %c0_1 = arith.constant 0 : index
    %c0_2 = arith.constant 0 : index
    %1 = vector.load %arg2[%c0_1, %c0_2] : memref<64x128xbf16, #tpu.memory_space<vmem>>, vector<64x128xbf16>
    %cst = arith.constant dense<0.000000e+00> : vector<16x128xf32>
    %2 = tpu.matmul %0, %1, %cst {dimension_numbers = #tpu.dot_dimension_numbers<[1], [0], [0], [1], [0, 0, 1, 1], [], []>} : vector<16x64xbf16>, vector<64x128xbf16>, vector<16x128xf32> -> vector<16x128xf32>
    %c0_3 = arith.constant 0 : index
    %c0_4 = arith.constant 0 : index
    %3 = vector.load %arg3[%c0_3, %c0_4] : memref<1x128xf32, #tpu.memory_space<vmem>>, vector<1x128xf32>
    %4 = vector.broadcast %3 : vector<1x128xf32> to vector<16x128xf32>
    %5 = arith.addf %2, %4 : vector<16x128xf32>
    %6 = arith.truncf %5 : vector<16x128xf32> to vector<16x128xbf16>
    %c0_5 = arith.constant 0 : index
    %c0_6 = arith.constant 0 : index
    %7 = vector.load %arg4[%c0_5, %c0_6] : memref<16x128xbf16, #tpu.memory_space<vmem>>, vector<16x128xbf16>
    tpu.vector_store %arg4[%c0_5, %c0_6], %6 {strides = array<i32>} : memref<16x128xbf16, #tpu.memory_space<vmem>>, vector<16x128xbf16>,
    return
  }
  func.func @transform_0(%arg0: i32) -> (i32, i32) {
    %c0_i32 = arith.constant 0 : i32
    %c0_i32_0 = arith.constant 0 : i32
    return %arg0, %c0_i32 : i32, i32
  }
  func.func @transform_1(%arg0: i32) -> (i32, i32) {
    %c0_i32 = arith.constant 0 : i32
    %c0_i32_0 = arith.constant 0 : i32
    %c0_i32_1 = arith.constant 0 : i32
    return %c0_i32, %c0_i32_0 : i32, i32
  }
  func.func @transform_2(%arg0: i32) -> (i32, i32) {
    %c0_i32 = arith.constant 0 : i32
    %c0_i32_0 = arith.constant 0 : i32
    %c0_i32_1 = arith.constant 0 : i32
    return %c0_i32, %c0_i32_0 : i32, i32
  }
  func.func @transform_3(%arg0: i32) -> (i32, i32) {
    %c0_i32 = arith.constant 0 : i32
    %c0_i32_0 = arith.constant 0 : i32
    return %arg0, %c0_i32 : i32, i32
  }
}

module attributes {stable_mosaic.version = 11 : i64} {
  func.func @_conv_concat_stats_kernel(%arg0: i32, %arg1: memref<32x64xbf16, #tpu.memory_space<vmem>>, %arg2: memref<32x64xbf16, #tpu.memory_space<vmem>>, %arg3: memref<3x64x128xbf16, #tpu.memory_space<vmem>>, %arg4: memref<3x64x128xbf16, #tpu.memory_space<vmem>>, %arg5: memref<32x128xbf16, #tpu.memory_space<vmem>>, %arg6: memref<1x1x128xf32, #tpu.memory_space<vmem>>, %arg7: memref<1x1x128xf32, #tpu.memory_space<vmem>>) attributes {dimension_semantics = [#tpu.dimension_semantics<parallel>], iteration_bounds = array<i64: 1>, scalar_prefetch = 0 : i64, scratch_operands = 0 : i64, tpu.core_type = #tpu.core_type<tc>, window_params = [{transform_indices = @transform_0, window_bounds = array<i64: 32, 64>}, {transform_indices = @transform_1, window_bounds = array<i64: 32, 64>}, {pipeline_mode = #tpu.pipeline_mode<synchronous>, transform_indices = @transform_2, window_bounds = array<i64: 3, 64, 128>}, {pipeline_mode = #tpu.pipeline_mode<synchronous>, transform_indices = @transform_3, window_bounds = array<i64: 3, 64, 128>}, {transform_indices = @transform_4, window_bounds = array<i64: 32, 128>}, {transform_indices = @transform_5, window_bounds = array<i64: 1, 1, 128>}, {transform_indices = @transform_6, window_bounds = array<i64: 1, 1, 128>}]} {
    %c0 = arith.constant 0 : index
    %c0_0 = arith.constant 0 : index
    %0 = vector.load %arg1[%c0, %c0_0] : memref<32x64xbf16, #tpu.memory_space<vmem>>, vector<32x64xbf16>
    %c1 = arith.constant 1 : index
    %c0_1 = arith.constant 0 : index
    %c0_2 = arith.constant 0 : index
    %1 = vector.load %arg3[%c1, %c0_1, %c0_2] : memref<3x64x128xbf16, #tpu.memory_space<vmem>>, vector<1x64x128xbf16>
    %2 = vector.shape_cast %1 : vector<1x64x128xbf16> to vector<64x128xbf16>
    %cst = arith.constant dense<0.000000e+00> : vector<32x128xf32>
    %3 = tpu.matmul %0, %2, %cst {dimension_numbers = #tpu.dot_dimension_numbers<[1], [0], [0], [1], [0, 0, 1, 1], [], []>} : vector<32x64xbf16>, vector<64x128xbf16>, vector<32x128xf32> -> vector<32x128xf32>
    %c0_3 = arith.constant 0 : index
    %c0_4 = arith.constant 0 : index
    %c0_5 = arith.constant 0 : index
    %4 = vector.load %arg3[%c0_3, %c0_4, %c0_5] : memref<3x64x128xbf16, #tpu.memory_space<vmem>>, vector<1x64x128xbf16>
    %5 = vector.shape_cast %4 : vector<1x64x128xbf16> to vector<64x128xbf16>
    %cst_6 = arith.constant dense<0.000000e+00> : vector<32x128xf32>
    %6 = tpu.matmul %0, %5, %cst_6 {dimension_numbers = #tpu.dot_dimension_numbers<[1], [0], [0], [1], [0, 0, 1, 1], [], []>} : vector<32x64xbf16>, vector<64x128xbf16>, vector<32x128xf32> -> vector<32x128xf32>
    %c2 = arith.constant 2 : index
    %c0_7 = arith.constant 0 : index
    %c0_8 = arith.constant 0 : index
    %7 = vector.load %arg3[%c2, %c0_7, %c0_8] : memref<3x64x128xbf16, #tpu.memory_space<vmem>>, vector<1x64x128xbf16>
    %8 = vector.shape_cast %7 : vector<1x64x128xbf16> to vector<64x128xbf16>
    %cst_9 = arith.constant dense<0.000000e+00> : vector<32x128xf32>
    %9 = tpu.matmul %0, %8, %cst_9 {dimension_numbers = #tpu.dot_dimension_numbers<[1], [0], [0], [1], [0, 0, 1, 1], [], []>} : vector<32x64xbf16>, vector<64x128xbf16>, vector<32x128xf32> -> vector<32x128xf32>
    %10 = tpu.iota {dimensions = array<i32: 0>} : vector<32x128xi32>
    %c16_i32 = arith.constant 16 : i32
    %c0_i32 = arith.constant 0 : i32
    %11 = arith.cmpi eq, %c16_i32, %c0_i32 : i32
    %c1_i32 = arith.constant 1 : i32
    %12 = arith.select %11, %c1_i32, %c16_i32 : i32
    %13 = vector.broadcast %12 : i32 to vector<32x128xi32>
    %14 = arith.remsi %10, %13 : vector<32x128xi32>
    %c0_i32_10 = arith.constant 0 : i32
    %15 = vector.broadcast %c0_i32_10 : i32 to vector<32x128xi32>
    %16 = arith.cmpi ne, %14, %15 : vector<32x128xi32>
    %c0_i32_11 = arith.constant 0 : i32
    %17 = vector.broadcast %c0_i32_11 : i32 to vector<32x128xi32>
    %18 = arith.cmpi slt, %14, %17 : vector<32x128xi32>
    %c0_i32_12 = arith.constant 0 : i32
    %19 = arith.cmpi slt, %12, %c0_i32_12 : i32
    %20 = vector.broadcast %19 : i1 to vector<32x128xi1>
    %21 = vector.broadcast %20 : vector<32x128xi1> to vector<32x128xi1>
    %22 = arith.xori %18, %21 : vector<32x128xi1>
    %23 = arith.andi %22, %16 : vector<32x128xi1>
    %24 = vector.broadcast %12 : i32 to vector<32x128xi32>
    %25 = arith.addi %14, %24 : vector<32x128xi32>
    %26 = arith.select %23, %25, %14 : vector<32x128xi1>, vector<32x128xi32>
    %c1_i32_13 = arith.constant 1 : i32
    %27 = tpu.dynamic_rotate %6 by %c1_i32_13 dim 0 : vector<32x128xf32>, i32 -> vector<32x128xf32>
    %c31_i32 = arith.constant 31 : i32
    %28 = tpu.dynamic_rotate %9 by %c31_i32 dim 0 : vector<32x128xf32>, i32 -> vector<32x128xf32>
    %cst_14 = arith.constant 0.000000e+00 : f32
    %29 = vector.broadcast %cst_14 : f32 to vector<32x128xf32>
    %c0_i32_15 = arith.constant 0 : i32
    %30 = vector.broadcast %c0_i32_15 : i32 to vector<32x128xi32>
    %31 = arith.cmpi eq, %26, %30 : vector<32x128xi32>
    %32 = arith.select %31, %29, %27 : vector<32x128xi1>, vector<32x128xf32>
    %33 = arith.addf %3, %32 : vector<32x128xf32>
    %c15_i32 = arith.constant 15 : i32
    %34 = vector.broadcast %c15_i32 : i32 to vector<32x128xi32>
    %35 = arith.cmpi eq, %26, %34 : vector<32x128xi32>
    %36 = arith.select %35, %29, %28 : vector<32x128xi1>, vector<32x128xf32>
    %37 = arith.addf %33, %36 : vector<32x128xf32>
    %c0_16 = arith.constant 0 : index
    %c0_17 = arith.constant 0 : index
    %38 = vector.load %arg2[%c0_16, %c0_17] : memref<32x64xbf16, #tpu.memory_space<vmem>>, vector<32x64xbf16>
    %c1_18 = arith.constant 1 : index
    %c0_19 = arith.constant 0 : index
    %c0_20 = arith.constant 0 : index
    %39 = vector.load %arg4[%c1_18, %c0_19, %c0_20] : memref<3x64x128xbf16, #tpu.memory_space<vmem>>, vector<1x64x128xbf16>
    %40 = vector.shape_cast %39 : vector<1x64x128xbf16> to vector<64x128xbf16>
    %cst_21 = arith.constant dense<0.000000e+00> : vector<32x128xf32>
    %41 = tpu.matmul %38, %40, %cst_21 {dimension_numbers = #tpu.dot_dimension_numbers<[1], [0], [0], [1], [0, 0, 1, 1], [], []>} : vector<32x64xbf16>, vector<64x128xbf16>, vector<32x128xf32> -> vector<32x128xf32>
    %c0_22 = arith.constant 0 : index
    %c0_23 = arith.constant 0 : index
    %c0_24 = arith.constant 0 : index
    %42 = vector.load %arg4[%c0_22, %c0_23, %c0_24] : memref<3x64x128xbf16, #tpu.memory_space<vmem>>, vector<1x64x128xbf16>
    %43 = vector.shape_cast %42 : vector<1x64x128xbf16> to vector<64x128xbf16>
    %cst_25 = arith.constant dense<0.000000e+00> : vector<32x128xf32>
    %44 = tpu.matmul %38, %43, %cst_25 {dimension_numbers = #tpu.dot_dimension_numbers<[1], [0], [0], [1], [0, 0, 1, 1], [], []>} : vector<32x64xbf16>, vector<64x128xbf16>, vector<32x128xf32> -> vector<32x128xf32>
    %c2_26 = arith.constant 2 : index
    %c0_27 = arith.constant 0 : index
    %c0_28 = arith.constant 0 : index
    %45 = vector.load %arg4[%c2_26, %c0_27, %c0_28] : memref<3x64x128xbf16, #tpu.memory_space<vmem>>, vector<1x64x128xbf16>
    %46 = vector.shape_cast %45 : vector<1x64x128xbf16> to vector<64x128xbf16>
    %cst_29 = arith.constant dense<0.000000e+00> : vector<32x128xf32>
    %47 = tpu.matmul %38, %46, %cst_29 {dimension_numbers = #tpu.dot_dimension_numbers<[1], [0], [0], [1], [0, 0, 1, 1], [], []>} : vector<32x64xbf16>, vector<64x128xbf16>, vector<32x128xf32> -> vector<32x128xf32>
    %48 = tpu.iota {dimensions = array<i32: 0>} : vector<32x128xi32>
    %c16_i32_30 = arith.constant 16 : i32
    %c0_i32_31 = arith.constant 0 : i32
    %49 = arith.cmpi eq, %c16_i32_30, %c0_i32_31 : i32
    %c1_i32_32 = arith.constant 1 : i32
    %50 = arith.select %49, %c1_i32_32, %c16_i32_30 : i32
    %51 = vector.broadcast %50 : i32 to vector<32x128xi32>
    %52 = arith.remsi %48, %51 : vector<32x128xi32>
    %c0_i32_33 = arith.constant 0 : i32
    %53 = vector.broadcast %c0_i32_33 : i32 to vector<32x128xi32>
    %54 = arith.cmpi ne, %52, %53 : vector<32x128xi32>
    %c0_i32_34 = arith.constant 0 : i32
    %55 = vector.broadcast %c0_i32_34 : i32 to vector<32x128xi32>
    %56 = arith.cmpi slt, %52, %55 : vector<32x128xi32>
    %c0_i32_35 = arith.constant 0 : i32
    %57 = arith.cmpi slt, %50, %c0_i32_35 : i32
    %58 = vector.broadcast %57 : i1 to vector<32x128xi1>
    %59 = vector.broadcast %58 : vector<32x128xi1> to vector<32x128xi1>
    %60 = arith.xori %56, %59 : vector<32x128xi1>
    %61 = arith.andi %60, %54 : vector<32x128xi1>
    %62 = vector.broadcast %50 : i32 to vector<32x128xi32>
    %63 = arith.addi %52, %62 : vector<32x128xi32>
    %64 = arith.select %61, %63, %52 : vector<32x128xi1>, vector<32x128xi32>
    %c1_i32_36 = arith.constant 1 : i32
    %65 = tpu.dynamic_rotate %44 by %c1_i32_36 dim 0 : vector<32x128xf32>, i32 -> vector<32x128xf32>
    %c31_i32_37 = arith.constant 31 : i32
    %66 = tpu.dynamic_rotate %47 by %c31_i32_37 dim 0 : vector<32x128xf32>, i32 -> vector<32x128xf32>
    %cst_38 = arith.constant 0.000000e+00 : f32
    %67 = vector.broadcast %cst_38 : f32 to vector<32x128xf32>
    %c0_i32_39 = arith.constant 0 : i32
    %68 = vector.broadcast %c0_i32_39 : i32 to vector<32x128xi32>
    %69 = arith.cmpi eq, %64, %68 : vector<32x128xi32>
    %70 = arith.select %69, %67, %65 : vector<32x128xi1>, vector<32x128xf32>
    %71 = arith.addf %41, %70 : vector<32x128xf32>
    %c15_i32_40 = arith.constant 15 : i32
    %72 = vector.broadcast %c15_i32_40 : i32 to vector<32x128xi32>
    %73 = arith.cmpi eq, %64, %72 : vector<32x128xi32>
    %74 = arith.select %73, %67, %66 : vector<32x128xi1>, vector<32x128xf32>
    %75 = arith.addf %71, %74 : vector<32x128xf32>
    %76 = arith.addf %37, %75 : vector<32x128xf32>
    %77 = arith.truncf %76 : vector<32x128xf32> to vector<32x128xbf16>
    %c0_41 = arith.constant 0 : index
    %c0_42 = arith.constant 0 : index
    %78 = vector.load %arg5[%c0_41, %c0_42] : memref<32x128xbf16, #tpu.memory_space<vmem>>, vector<32x128xbf16>
    tpu.vector_store %arg5[%c0_41, %c0_42], %77 {strides = array<i32>} : memref<32x128xbf16, #tpu.memory_space<vmem>>, vector<32x128xbf16>,
    %cst_43 = arith.constant dense<0.000000e+00> : vector<128xf32>
    %79 = vector.multi_reduction <add>, %76, %cst_43 [0] : vector<32x128xf32> to vector<128xf32>
    %80 = vector.shape_cast %79 : vector<128xf32> to vector<1x128xf32>
    %c0_44 = arith.constant 0 : index
    %c0_45 = arith.constant 0 : index
    %c0_46 = arith.constant 0 : index
    %81 = vector.load %arg6[%c0_44, %c0_45, %c0_46] : memref<1x1x128xf32, #tpu.memory_space<vmem>>, vector<1x1x128xf32>
    %82 = vector.shape_cast %81 : vector<1x1x128xf32> to vector<1x128xf32>
    %83 = vector.shape_cast %80 : vector<1x128xf32> to vector<1x1x128xf32>
    tpu.vector_store %arg6[%c0_44, %c0_45, %c0_46], %83 {strides = array<i32>} : memref<1x1x128xf32, #tpu.memory_space<vmem>>, vector<1x1x128xf32>,
    %84 = arith.mulf %76, %76 : vector<32x128xf32>
    %cst_47 = arith.constant dense<0.000000e+00> : vector<128xf32>
    %85 = vector.multi_reduction <add>, %84, %cst_47 [0] : vector<32x128xf32> to vector<128xf32>
    %86 = vector.shape_cast %85 : vector<128xf32> to vector<1x128xf32>
    %c0_48 = arith.constant 0 : index
    %c0_49 = arith.constant 0 : index
    %c0_50 = arith.constant 0 : index
    %87 = vector.load %arg7[%c0_48, %c0_49, %c0_50] : memref<1x1x128xf32, #tpu.memory_space<vmem>>, vector<1x1x128xf32>
    %88 = vector.shape_cast %87 : vector<1x1x128xf32> to vector<1x128xf32>
    %89 = vector.shape_cast %86 : vector<1x128xf32> to vector<1x1x128xf32>
    tpu.vector_store %arg7[%c0_48, %c0_49, %c0_50], %89 {strides = array<i32>} : memref<1x1x128xf32, #tpu.memory_space<vmem>>, vector<1x1x128xf32>,
    return
  }
  func.func @transform_0(%arg0: i32) -> (i32, i32) {
    %c0_i32 = arith.constant 0 : i32
    %c0_i32_0 = arith.constant 0 : i32
    return %arg0, %c0_i32 : i32, i32
  }
  func.func @transform_1(%arg0: i32) -> (i32, i32) {
    %c0_i32 = arith.constant 0 : i32
    %c0_i32_0 = arith.constant 0 : i32
    return %arg0, %c0_i32 : i32, i32
  }
  func.func @transform_2(%arg0: i32) -> (i32, i32, i32) {
    %c0_i32 = arith.constant 0 : i32
    %c0_i32_0 = arith.constant 0 : i32
    %c0_i32_1 = arith.constant 0 : i32
    %c0_i32_2 = arith.constant 0 : i32
    return %c0_i32, %c0_i32_0, %c0_i32_1 : i32, i32, i32
  }
  func.func @transform_3(%arg0: i32) -> (i32, i32, i32) {
    %c0_i32 = arith.constant 0 : i32
    %c0_i32_0 = arith.constant 0 : i32
    %c0_i32_1 = arith.constant 0 : i32
    %c0_i32_2 = arith.constant 0 : i32
    return %c0_i32, %c0_i32_0, %c0_i32_1 : i32, i32, i32
  }
  func.func @transform_4(%arg0: i32) -> (i32, i32) {
    %c0_i32 = arith.constant 0 : i32
    %c0_i32_0 = arith.constant 0 : i32
    return %arg0, %c0_i32 : i32, i32
  }
  func.func @transform_5(%arg0: i32) -> (i32, i32, i32) {
    %c0_i32 = arith.constant 0 : i32
    %c0_i32_0 = arith.constant 0 : i32
    %c0_i32_1 = arith.constant 0 : i32
    return %arg0, %c0_i32, %c0_i32_0 : i32, i32, i32
  }
  func.func @transform_6(%arg0: i32) -> (i32, i32, i32) {
    %c0_i32 = arith.constant 0 : i32
    %c0_i32_0 = arith.constant 0 : i32
    %c0_i32_1 = arith.constant 0 : i32
    return %arg0, %c0_i32, %c0_i32_0 : i32, i32, i32
  }
}

module attributes {stable_mosaic.version = 11 : i64} {
  func.func @_bn_relu_conv_stats_kernel(%arg0: i32, %arg1: memref<32x128xbf16, #tpu.memory_space<vmem>>, %arg2: memref<1x128xf32, #tpu.memory_space<vmem>>, %arg3: memref<1x128xf32, #tpu.memory_space<vmem>>, %arg4: memref<3x128x128xbf16, #tpu.memory_space<vmem>>, %arg5: memref<32x128xbf16, #tpu.memory_space<vmem>>, %arg6: memref<1x1x128xf32, #tpu.memory_space<vmem>>, %arg7: memref<1x1x128xf32, #tpu.memory_space<vmem>>) attributes {dimension_semantics = [#tpu.dimension_semantics<parallel>], iteration_bounds = array<i64: 1>, scalar_prefetch = 0 : i64, scratch_operands = 0 : i64, tpu.core_type = #tpu.core_type<tc>, window_params = [{transform_indices = @transform_0, window_bounds = array<i64: 32, 128>}, {pipeline_mode = #tpu.pipeline_mode<synchronous>, transform_indices = @transform_1, window_bounds = array<i64: 1, 128>}, {pipeline_mode = #tpu.pipeline_mode<synchronous>, transform_indices = @transform_2, window_bounds = array<i64: 1, 128>}, {pipeline_mode = #tpu.pipeline_mode<synchronous>, transform_indices = @transform_3, window_bounds = array<i64: 3, 128, 128>}, {transform_indices = @transform_4, window_bounds = array<i64: 32, 128>}, {transform_indices = @transform_5, window_bounds = array<i64: 1, 1, 128>}, {transform_indices = @transform_6, window_bounds = array<i64: 1, 1, 128>}]} {
    %c0 = arith.constant 0 : index
    %c0_0 = arith.constant 0 : index
    %0 = vector.load %arg1[%c0, %c0_0] : memref<32x128xbf16, #tpu.memory_space<vmem>>, vector<32x128xbf16>
    %1 = arith.extf %0 : vector<32x128xbf16> to vector<32x128xf32>
    %c0_1 = arith.constant 0 : index
    %c0_2 = arith.constant 0 : index
    %2 = vector.load %arg2[%c0_1, %c0_2] : memref<1x128xf32, #tpu.memory_space<vmem>>, vector<1x128xf32>
    %3 = vector.broadcast %2 : vector<1x128xf32> to vector<32x128xf32>
    %4 = arith.mulf %1, %3 : vector<32x128xf32>
    %c0_3 = arith.constant 0 : index
    %c0_4 = arith.constant 0 : index
    %5 = vector.load %arg3[%c0_3, %c0_4] : memref<1x128xf32, #tpu.memory_space<vmem>>, vector<1x128xf32>
    %6 = vector.broadcast %5 : vector<1x128xf32> to vector<32x128xf32>
    %7 = arith.addf %4, %6 : vector<32x128xf32>
    %cst = arith.constant 0.000000e+00 : f32
    %8 = vector.broadcast %cst : f32 to vector<32x128xf32>
    %9 = arith.maximumf %7, %8 : vector<32x128xf32>
    %10 = arith.truncf %9 : vector<32x128xf32> to vector<32x128xbf16>
    %c1 = arith.constant 1 : index
    %c0_5 = arith.constant 0 : index
    %c0_6 = arith.constant 0 : index
    %11 = vector.load %arg4[%c1, %c0_5, %c0_6] : memref<3x128x128xbf16, #tpu.memory_space<vmem>>, vector<1x128x128xbf16>
    %12 = vector.shape_cast %11 : vector<1x128x128xbf16> to vector<128x128xbf16>
    %cst_7 = arith.constant dense<0.000000e+00> : vector<32x128xf32>
    %13 = tpu.matmul %10, %12, %cst_7 {dimension_numbers = #tpu.dot_dimension_numbers<[1], [0], [0], [1], [0, 0, 1, 1], [], []>} : vector<32x128xbf16>, vector<128x128xbf16>, vector<32x128xf32> -> vector<32x128xf32>
    %c0_8 = arith.constant 0 : index
    %c0_9 = arith.constant 0 : index
    %c0_10 = arith.constant 0 : index
    %14 = vector.load %arg4[%c0_8, %c0_9, %c0_10] : memref<3x128x128xbf16, #tpu.memory_space<vmem>>, vector<1x128x128xbf16>
    %15 = vector.shape_cast %14 : vector<1x128x128xbf16> to vector<128x128xbf16>
    %cst_11 = arith.constant dense<0.000000e+00> : vector<32x128xf32>
    %16 = tpu.matmul %10, %15, %cst_11 {dimension_numbers = #tpu.dot_dimension_numbers<[1], [0], [0], [1], [0, 0, 1, 1], [], []>} : vector<32x128xbf16>, vector<128x128xbf16>, vector<32x128xf32> -> vector<32x128xf32>
    %c2 = arith.constant 2 : index
    %c0_12 = arith.constant 0 : index
    %c0_13 = arith.constant 0 : index
    %17 = vector.load %arg4[%c2, %c0_12, %c0_13] : memref<3x128x128xbf16, #tpu.memory_space<vmem>>, vector<1x128x128xbf16>
    %18 = vector.shape_cast %17 : vector<1x128x128xbf16> to vector<128x128xbf16>
    %cst_14 = arith.constant dense<0.000000e+00> : vector<32x128xf32>
    %19 = tpu.matmul %10, %18, %cst_14 {dimension_numbers = #tpu.dot_dimension_numbers<[1], [0], [0], [1], [0, 0, 1, 1], [], []>} : vector<32x128xbf16>, vector<128x128xbf16>, vector<32x128xf32> -> vector<32x128xf32>
    %20 = tpu.iota {dimensions = array<i32: 0>} : vector<32x128xi32>
    %c16_i32 = arith.constant 16 : i32
    %c0_i32 = arith.constant 0 : i32
    %21 = arith.cmpi eq, %c16_i32, %c0_i32 : i32
    %c1_i32 = arith.constant 1 : i32
    %22 = arith.select %21, %c1_i32, %c16_i32 : i32
    %23 = vector.broadcast %22 : i32 to vector<32x128xi32>
    %24 = arith.remsi %20, %23 : vector<32x128xi32>
    %c0_i32_15 = arith.constant 0 : i32
    %25 = vector.broadcast %c0_i32_15 : i32 to vector<32x128xi32>
    %26 = arith.cmpi ne, %24, %25 : vector<32x128xi32>
    %c0_i32_16 = arith.constant 0 : i32
    %27 = vector.broadcast %c0_i32_16 : i32 to vector<32x128xi32>
    %28 = arith.cmpi slt, %24, %27 : vector<32x128xi32>
    %c0_i32_17 = arith.constant 0 : i32
    %29 = arith.cmpi slt, %22, %c0_i32_17 : i32
    %30 = vector.broadcast %29 : i1 to vector<32x128xi1>
    %31 = vector.broadcast %30 : vector<32x128xi1> to vector<32x128xi1>
    %32 = arith.xori %28, %31 : vector<32x128xi1>
    %33 = arith.andi %32, %26 : vector<32x128xi1>
    %34 = vector.broadcast %22 : i32 to vector<32x128xi32>
    %35 = arith.addi %24, %34 : vector<32x128xi32>
    %36 = arith.select %33, %35, %24 : vector<32x128xi1>, vector<32x128xi32>
    %c1_i32_18 = arith.constant 1 : i32
    %37 = tpu.dynamic_rotate %16 by %c1_i32_18 dim 0 : vector<32x128xf32>, i32 -> vector<32x128xf32>
    %c31_i32 = arith.constant 31 : i32
    %38 = tpu.dynamic_rotate %19 by %c31_i32 dim 0 : vector<32x128xf32>, i32 -> vector<32x128xf32>
    %cst_19 = arith.constant 0.000000e+00 : f32
    %39 = vector.broadcast %cst_19 : f32 to vector<32x128xf32>
    %c0_i32_20 = arith.constant 0 : i32
    %40 = vector.broadcast %c0_i32_20 : i32 to vector<32x128xi32>
    %41 = arith.cmpi eq, %36, %40 : vector<32x128xi32>
    %42 = arith.select %41, %39, %37 : vector<32x128xi1>, vector<32x128xf32>
    %43 = arith.addf %13, %42 : vector<32x128xf32>
    %c15_i32 = arith.constant 15 : i32
    %44 = vector.broadcast %c15_i32 : i32 to vector<32x128xi32>
    %45 = arith.cmpi eq, %36, %44 : vector<32x128xi32>
    %46 = arith.select %45, %39, %38 : vector<32x128xi1>, vector<32x128xf32>
    %47 = arith.addf %43, %46 : vector<32x128xf32>
    %48 = arith.truncf %47 : vector<32x128xf32> to vector<32x128xbf16>
    %c0_21 = arith.constant 0 : index
    %c0_22 = arith.constant 0 : index
    %49 = vector.load %arg5[%c0_21, %c0_22] : memref<32x128xbf16, #tpu.memory_space<vmem>>, vector<32x128xbf16>
    tpu.vector_store %arg5[%c0_21, %c0_22], %48 {strides = array<i32>} : memref<32x128xbf16, #tpu.memory_space<vmem>>, vector<32x128xbf16>,
    %cst_23 = arith.constant dense<0.000000e+00> : vector<128xf32>
    %50 = vector.multi_reduction <add>, %47, %cst_23 [0] : vector<32x128xf32> to vector<128xf32>
    %51 = vector.shape_cast %50 : vector<128xf32> to vector<1x128xf32>
    %c0_24 = arith.constant 0 : index
    %c0_25 = arith.constant 0 : index
    %c0_26 = arith.constant 0 : index
    %52 = vector.load %arg6[%c0_24, %c0_25, %c0_26] : memref<1x1x128xf32, #tpu.memory_space<vmem>>, vector<1x1x128xf32>
    %53 = vector.shape_cast %52 : vector<1x1x128xf32> to vector<1x128xf32>
    %54 = vector.shape_cast %51 : vector<1x128xf32> to vector<1x1x128xf32>
    tpu.vector_store %arg6[%c0_24, %c0_25, %c0_26], %54 {strides = array<i32>} : memref<1x1x128xf32, #tpu.memory_space<vmem>>, vector<1x1x128xf32>,
    %55 = arith.mulf %47, %47 : vector<32x128xf32>
    %cst_27 = arith.constant dense<0.000000e+00> : vector<128xf32>
    %56 = vector.multi_reduction <add>, %55, %cst_27 [0] : vector<32x128xf32> to vector<128xf32>
    %57 = vector.shape_cast %56 : vector<128xf32> to vector<1x128xf32>
    %c0_28 = arith.constant 0 : index
    %c0_29 = arith.constant 0 : index
    %c0_30 = arith.constant 0 : index
    %58 = vector.load %arg7[%c0_28, %c0_29, %c0_30] : memref<1x1x128xf32, #tpu.memory_space<vmem>>, vector<1x1x128xf32>
    %59 = vector.shape_cast %58 : vector<1x1x128xf32> to vector<1x128xf32>
    %60 = vector.shape_cast %57 : vector<1x128xf32> to vector<1x1x128xf32>
    tpu.vector_store %arg7[%c0_28, %c0_29, %c0_30], %60 {strides = array<i32>} : memref<1x1x128xf32, #tpu.memory_space<vmem>>, vector<1x1x128xf32>,
    return
  }
  func.func @transform_0(%arg0: i32) -> (i32, i32) {
    %c0_i32 = arith.constant 0 : i32
    %c0_i32_0 = arith.constant 0 : i32
    return %arg0, %c0_i32 : i32, i32
  }
  func.func @transform_1(%arg0: i32) -> (i32, i32) {
    %c0_i32 = arith.constant 0 : i32
    %c0_i32_0 = arith.constant 0 : i32
    %c0_i32_1 = arith.constant 0 : i32
    return %c0_i32, %c0_i32_0 : i32, i32
  }
  func.func @transform_2(%arg0: i32) -> (i32, i32) {
    %c0_i32 = arith.constant 0 : i32
    %c0_i32_0 = arith.constant 0 : i32
    %c0_i32_1 = arith.constant 0 : i32
    return %c0_i32, %c0_i32_0 : i32, i32
  }
  func.func @transform_3(%arg0: i32) -> (i32, i32, i32) {
    %c0_i32 = arith.constant 0 : i32
    %c0_i32_0 = arith.constant 0 : i32
    %c0_i32_1 = arith.constant 0 : i32
    %c0_i32_2 = arith.constant 0 : i32
    return %c0_i32, %c0_i32_0, %c0_i32_1 : i32, i32, i32
  }
  func.func @transform_4(%arg0: i32) -> (i32, i32) {
    %c0_i32 = arith.constant 0 : i32
    %c0_i32_0 = arith.constant 0 : i32
    return %arg0, %c0_i32 : i32, i32
  }
  func.func @transform_5(%arg0: i32) -> (i32, i32, i32) {
    %c0_i32 = arith.constant 0 : i32
    %c0_i32_0 = arith.constant 0 : i32
    %c0_i32_1 = arith.constant 0 : i32
    return %arg0, %c0_i32, %c0_i32_0 : i32, i32, i32
  }
  func.func @transform_6(%arg0: i32) -> (i32, i32, i32) {
    %c0_i32 = arith.constant 0 : i32
    %c0_i32_0 = arith.constant 0 : i32
    %c0_i32_1 = arith.constant 0 : i32
    return %arg0, %c0_i32, %c0_i32_0 : i32, i32, i32
  }
}

</mosaic_0001>

<llo_original>
// kernel: tile.16
$region0: #{tile.16}
  #allocation0 [shape = 's32[1]{0}', space=sflag, size = 0x4, scoped, tag = 'scoped memory for tile.16']
  %s0 = inlined_call_operand.vmem [shape: f32[4], index: 0, kind: input, shape index: {}]
  %s1 = inlined_call_operand.vmem [shape: f32[32,4], index: 1, kind: output, shape index: {}]
  // Predicated region
  $region2: #{tile.16} parent=0 // pred_check
    _
  $region3: #{tile.16} parent=0 // pred_check_branch
    %3 = sbr.rel (0) target = $region5
  $region4: #{tile.16} parent=0 // pred_region
    _
  $region5: #{tile.16} parent=0 // pred_fallthru
    _
  %v4 = vld [vmem:[%s0] ss:$0 sm:$0xff]
  %5 = vst [vmem:[%s1] sm:$0xff] %v4
  %s6 = scalar_lea.vmem %s1, 8
  %7 = vst [vmem:[%s6] sm:$0xff] %v4
  %s8 = scalar_lea.vmem %s1, 16
  %9 = vst [vmem:[%s8] sm:$0xff] %v4
  %s10 = scalar_lea.vmem %s1, 24
  %11 = vst [vmem:[%s10] sm:$0xff] %v4

// kernel: tile.17
$region0: #{tile.17}
  %s0 = inlined_call_operand.vmem [shape: f32[32,4], index: 0, kind: input, shape index: {}]
  %s1 = inlined_call_operand.vmem [shape: f32[1,128], index: 1, kind: output, shape index: {}]
  $region1: #{tile.17} parent=0
    #allocation0 [shape = 'u8[4096]{0}', space=vmem, size = 0x1000, scoped, tag = 'scoped mem for output reshape']
    %v2 = vld [vmem:[%s0] sm:$0x1]
    %vm3 = vcmask 31744
    %4 = vst.msk [vmem:[#allocation0] sm:$0x1] %vm3, %v2
    %s5 = scalar_lea.vmem %s0, 31
    %v6 = vld [vmem:[%s5] sm:$0x1]
    %7 = vrot.lane.b32.xlu0 %v6, 124
    %v8 = vpop.permute.xlu0 %7
    %vm9 = vcmask 1048544
    %10 = vst.msk [vmem:[#allocation0] sm:$0x1] %vm9, %v8
    %s11 = scalar_lea.vmem %s0, 30
    %v12 = vld [vmem:[%s11] sm:$0x1]
    %13 = vrot.lane.b32.xlu0 %v12, 120
    %v14 = vpop.permute.xlu0 %13
    %vm15 = vcmask 1015744
    %16 = vst.msk [vmem:[#allocation0] sm:$0x1] %vm15, %v14
    %s17 = scalar_lea.vmem %s0, 29
    %v18 = vld [vmem:[%s17] sm:$0x1]
    %19 = vrot.lane.b32.xlu0 %v18, 116
    %v20 = vpop.permute.xlu0 %19
    %vm21 = vcmask 982944
    %22 = vst.msk [vmem:[#allocation0] sm:$0x1] %vm21, %v20
    %s23 = scalar_lea.vmem %s0, 28
    %v24 = vld [vmem:[%s23] sm:$0x1]
    %25 = vrot.lane.b32.xlu0 %v24, 112
    %v26 = vpop.permute.xlu0 %25
    %vm27 = vcmask 950144
    %28 = vst.msk [vmem:[#allocation0] sm:$0x1] %vm27, %v26
    %s29 = scalar_lea.vmem %s0, 27
    %v30 = vld [vmem:[%s29] sm:$0x1]
    %31 = vrot.lane.b32.xlu0 %v30, 108
    %v32 = vpop.permute.xlu0 %31
    %vm33 = vcmask 917344
    %34 = vst.msk [vmem:[#allocation0] sm:$0x1] %vm33, %v32
    %s35 = scalar_lea.vmem %s0, 26
    %v36 = vld [vmem:[%s35] sm:$0x1]
    %37 = vrot.lane.b32.xlu0 %v36, 104
    %v38 = vpop.permute.xlu0 %37
    %vm39 = vcmask 884544
    %40 = vst.msk [vmem:[#allocation0] sm:$0x1] %vm39, %v38
    %s41 = scalar_lea.vmem %s0, 25
    %v42 = vld [vmem:[%s41] sm:$0x1]
    %43 = vrot.lane.b32.xlu0 %v42, 100
    %v44 = vpop.permute.xlu0 %43
    %vm45 = vcmask 851744
    %46 = vst.msk [vmem:[#allocation0] sm:$0x1] %vm45, %v44
    %s47 = scalar_lea.vmem %s0, 24
    %v48 = vld [vmem:[%s47] sm:$0x1]
    %49 = vrot.lane.b32.xlu0 %v48, 96
    %v50 = vpop.permute.xlu0 %49
    %vm51 = vcmask 818944
    %52 = vst.msk [vmem:[#allocation0] sm:$0x1] %vm51, %v50
    %s53 = scalar_lea.vmem %s0, 23
    %v54 = vld [vmem:[%s53] sm:$0x1]
    %55 = vrot.lane.b32.xlu0 %v54, 92
    %v56 = vpop.permute.xlu0 %55
    %vm57 = vcmask 786144
    %58 = vst.msk [vmem:[#allocation0] sm:$0x1] %vm57, %v56
    %s59 = scalar_lea.vmem %s0, 22
    %v60 = vld [vmem:[%s59] sm:$0x1]
    %61 = vrot.lane.b32.xlu0 %v60, 88
    %v62 = vpop.permute.xlu0 %61
    %vm63 = vcmask 753344
    %64 = vst.msk [vmem:[#allocation0] sm:$0x1] %vm63, %v62
    %s65 = scalar_lea.vmem %s0, 21
    %v66 = vld [vmem:[%s65] sm:$0x1]
    %67 = vrot.lane.b32.xlu0 %v66, 84
    %v68 = vpop.permute.xlu0 %67
    %vm69 = vcmask 720544
    %70 = vst.msk [vmem:[#allocation0] sm:$0x1] %vm69, %v68
    %s71 = scalar_lea.vmem %s0, 20
    %v72 = vld [vmem:[%s71] sm:$0x1]
    %73 = vrot.lane.b32.xlu0 %v72, 80
    %v74 = vpop.permute.xlu0 %73
    %vm75 = vcmask 687744
    %76 = vst.msk [vmem:[#allocation0] sm:$0x1] %vm75, %v74
    %s77 = scalar_lea.vmem %s0, 19
    %v78 = vld [vmem:[%s77] sm:$0x1]
    %79 = vrot.lane.b32.xlu0 %v78, 76
    %v80 = vpop.permute.xlu0 %79
    %vm81 = vcmask 654944
    %82 = vst.msk [vmem:[#allocation0] sm:$0x1] %vm81, %v80
    %s83 = scalar_lea.vmem %s0, 18
    %v84 = vld [vmem:[%s83] sm:$0x1]
    %85 = vrot.lane.b32.xlu0 %v84, 72
    %v86 = vpop.permute.xlu0 %85
    %vm87 = vcmask 622144
    %88 = vst.msk [vmem:[#allocation0] sm:$0x1] %vm87, %v86
    %s89 = scalar_lea.vmem %s0, 17
    %v90 = vld [vmem:[%s89] sm:$0x1]
    %91 = vrot.lane.b32.xlu0 %v90, 68
    %v92 = vpop.permute.xlu0 %91
    %vm93 = vcmask 589344
    %94 = vst.msk [vmem:[#allocation0] sm:$0x1] %vm93, %v92
    %s95 = scalar_lea.vmem %s0, 16
    %v96 = vld [vmem:[%s95] sm:$0x1]
    %97 = vrot.lane.b32.xlu0 %v96, 64
    %v98 = vpop.permute.xlu0 %97
    %vm99 = vcmask 556544
    %100 = vst.msk [vmem:[#allocation0] sm:$0x1] %vm99, %v98
    %s101 = scalar_lea.vmem %s0, 15
    %v102 = vld [vmem:[%s101] sm:$0x1]
    %103 = vrot.lane.b32.xlu0 %v102, 60
    %v104 = vpop.permute.xlu0 %103
    %vm105 = vcmask 523744
    %106 = vst.msk [vmem:[#allocation0] sm:$0x1] %vm105, %v104
    %s107 = scalar_lea.vmem %s0, 14
    %v108 = vld [vmem:[%s107] sm:$0x1]
    %109 = vrot.lane.b32.xlu0 %v108, 56
    %v110 = vpop.permute.xlu0 %109
    %vm111 = vcmask 490944
    %112 = vst.msk [vmem:[#allocation0] sm:$0x1] %vm111, %v110
    %s113 = scalar_lea.vmem %s0, 13
    %v114 = vld [vmem:[%s113] sm:$0x1]
    %115 = vrot.lane.b32.xlu0 %v114, 52
    %v116 = vpop.permute.xlu0 %115
    %vm117 = vcmask 458144
    %118 = vst.msk [vmem:[#allocation0] sm:$0x1] %vm117, %v116
    %s119 = scalar_lea.vmem %s0, 12
    %v120 = vld [vmem:[%s119] sm:$0x1]
    %121 = vrot.lane.b32.xlu0 %v120, 48
    %v122 = vpop.permute.xlu0 %121
    %vm123 = vcmask 425344
    %124 = vst.msk [vmem:[#allocation0] sm:$0x1] %vm123, %v122
    %s125 = scalar_lea.vmem %s0, 11
    %v126 = vld [vmem:[%s125] sm:$0x1]
    %127 = vrot.lane.b32.xlu0 %v126, 44
    %v128 = vpop.permute.xlu0 %127
    %vm129 = vcmask 392544
    %130 = vst.msk [vmem:[#allocation0] sm:$0x1] %vm129, %v128
    %s131 = scalar_lea.vmem %s0, 10
    %v132 = vld [vmem:[%s131] sm:$0x1]
    %133 = vrot.lane.b32.xlu0 %v132, 40
    %v134 = vpop.permute.xlu0 %133
    %vm135 = vcmask 359744
    %136 = vst.msk [vmem:[#allocation0] sm:$0x1] %vm135, %v134
    %s137 = scalar_lea.vmem %s0, 9
    %v138 = vld [vmem:[%s137] sm:$0x1]
    %139 = vrot.lane.b32.xlu0 %v138, 36
    %v140 = vpop.permute.xlu0 %139
    %vm141 = vcmask 326944
    %142 = vst.msk [vmem:[#allocation0] sm:$0x1] %vm141, %v140
    %s143 = scalar_lea.vmem %s0, 8
    %v144 = vld [vmem:[%s143] sm:$0x1]
    %145 = vrot.lane.b32.xlu0 %v144, 32
    %v146 = vpop.permute.xlu0 %145
    %vm147 = vcmask 294144
    %148 = vst.msk [vmem:[#allocation0] sm:$0x1] %vm147, %v146
    %s149 = scalar_lea.vmem %s0, 7
    %v150 = vld [vmem:[%s149] sm:$0x1]
    %151 = vrot.lane.b32.xlu0 %v150, 28
    %v152 = vpop.permute.xlu0 %151
    %vm153 = vcmask 261344
    %154 = vst.msk [vmem:[#allocation0] sm:$0x1] %vm153, %v152
    %s155 = scalar_lea.vmem %s0, 6
    %v156 = vld [vmem:[%s155] sm:$0x1]
    %157 = vrot.lane.b32.xlu0 %v156, 24
    %v158 = vpop.permute.xlu0 %157
    %vm159 = vcmask 228544
    %160 = vst.msk [vmem:[#allocation0] sm:$0x1] %vm159, %v158
    %s161 = scalar_lea.vmem %s0, 5
    %v162 = vld [vmem:[%s161] sm:$0x1]
    %163 = vrot.lane.b32.xlu0 %v162, 20
    %v164 = vpop.permute.xlu0 %163
    %vm165 = vcmask 195744
    %166 = vst.msk [vmem:[#allocation0] sm:$0x1] %vm165, %v164
    %s167 = scalar_lea.vmem %s0, 4
    %v168 = vld [vmem:[%s167] sm:$0x1]
    %169 = vrot.lane.b32.xlu0 %v168, 16
    %v170 = vpop.permute.xlu0 %169
    %vm171 = vcmask 162944
    %172 = vst.msk [vmem:[#allocation0] sm:$0x1] %vm171, %v170
    %s173 = scalar_lea.vmem %s0, 3
    %v174 = vld [vmem:[%s173] sm:$0x1]
    %175 = vrot.lane.b32.xlu0 %v174, 12
    %v176 = vpop.permute.xlu0 %175
    %vm177 = vcmask 130144
    %178 = vst.msk [vmem:[#allocation0] sm:$0x1] %vm177, %v176
    %s179 = scalar_lea.vmem %s0, 2
    %v180 = vld [vmem:[%s179] sm:$0x1]
    %181 = vrot.lane.b32.xlu0 %v180, 8
    %v182 = vpop.permute.xlu0 %181
    %vm183 = vcmask 97344
    %184 = vst.msk [vmem:[#allocation0] sm:$0x1] %vm183, %v182
    %s185 = scalar_lea.vmem %s0, 1
    %v186 = vld [vmem:[%s185] sm:$0x1]
    %187 = vrot.lane.b32.xlu0 %v186, 4
    %v188 = vpop.permute.xlu0 %187
    %vm189 = vcmask 64544
    %190 = vst.msk [vmem:[#allocation0] sm:$0x1] %vm189, %v188
    %s192 = sshllo.u32 0, 1
    %v194 = vld [vmem:[#allocation0] sm:%s192]
    %s195 = sshllo.u32 0, 1
    %196 = vst [vmem:[%s1] sm:%s195] %v194

// kernel: upconv_forward.3
$region0: #{upconv_forward.3}
  #allocation0 [shape = 'u32[]', space=smem, size = 0x4, offset = 0x4, fixed_abs, tag = 'smem constant byte address 0x4 - core index']
  #allocation1 [shape = 'u32[144,128]{1,0:T(1,128)}', space=vmem, size = 0x12000, scoped, tag = 'internal scratch']
  %s0 = inlined_call_operand.vmem [shape: bf16[16,64], index: 0, kind: input, shape index: {}]
  %s1 = inlined_call_operand.vmem [shape: bf16[64,128], index: 1, kind: input, shape index: {}]
  %s2 = inlined_call_operand.vmem [shape: f32[1,128], index: 2, kind: input, shape index: {}]
  %s3 = inlined_call_operand.vmem [shape: bf16[16,128], index: 3, kind: output, shape index: {}]
  %s4 = sld [smem:[#allocation0]]
  $region22: #{upconv_forward.3} parent=0
    _
  %s6 = ssub.s32 1, %s4
  %s7 = scalar_select 0, %s6, %s4
  // Predicated region
  $region2: #{upconv_forward.3} parent=0 // pred_check
    _
  $region3: #{upconv_forward.3} parent=0 // pred_check_branch
    %9 = sbr.rel (0) target = $region5
  $region4: #{upconv_forward.3} parent=0 // pred_region
    _
  $region5: #{upconv_forward.3} parent=0 // pred_fallthru
    _
  // Predicated region
  $region6: #{upconv_forward.3} parent=0 // pred_check
    _
  $region7: #{upconv_forward.3} parent=0 // pred_check_branch
    %11 = sbr.rel (0) target = $region9
  $region8: #{upconv_forward.3} parent=0 // pred_region
    _
  $region9: #{upconv_forward.3} parent=0 // pred_fallthru
    _
  // Predicated region
  $region10: #{upconv_forward.3} parent=0 // pred_check
    _
  $region11: #{upconv_forward.3} parent=0 // pred_check_branch
    %13 = sbr.rel (0) target = $region13
  $region12: #{upconv_forward.3} parent=0 // pred_region
    _
  $region13: #{upconv_forward.3} parent=0 // pred_fallthru
    _
  %v15 = vld [vmem:[%s0] sm:$0xf]
  %v16 = vld [vmem:[%s0 + $0x4] sm:$0xf]
  %v17 = vld [vmem:[%s1] sm:$0xf]
  %v18 = vld [vmem:[%s1 + $0x4] sm:$0xf]
  %v19 = vld [vmem:[%s1 + $0x8] sm:$0xf]
  %v20 = vld [vmem:[%s1 + $0xc] sm:$0xf]
  %v21 = vld [vmem:[%s1 + $0x10] sm:$0xf]
  %v22 = vld [vmem:[%s1 + $0x14] sm:$0xf]
  %v23 = vld [vmem:[%s1 + $0x18] sm:$0xf]
  %v24 = vld [vmem:[%s1 + $0x1c] sm:$0xf]
  %v25 = vld [vmem:[%s2] sm:$0x1]
  %v27 = vlaneseq
  %v28 = vshrl.u32 %v27, 7
  %v29 = vsub.s32 0, %v28
  %v30 = vrot.slane %v25, %v29
  %v34 = vunpack.c.l.b16 %v15
  %v35 = vunpack.c.l.b16 %v16
  %v36 = vpack.c.b16 %v35, %v34
  %v45 = vunpack.c.l.b16 %v17
  %v46 = vunpack.c.l.b16 %v18
  %v47 = vunpack.c.l.b16 %v19
  %v48 = vunpack.c.l.b16 %v20
  %v49 = vunpack.c.l.b16 %v21
  %v50 = vunpack.c.l.b16 %v22
  %v51 = vunpack.c.l.b16 %v23
  %v52 = vunpack.c.l.b16 %v24
  %v53 = vpack.c.b16 %v46, %v45
  %v54 = vpack.c.b16 %v48, %v47
  %v55 = vpack.c.b16 %v50, %v49
  %v56 = vpack.c.b16 %v52, %v51
  %vm61 = vcmask 523264
  %v63 = vsel %vm61, %v36, 0
  %65 = vmatprep.subr.bf16.mxu0 0
  %66 = vmatpush1.bf16.msra.mxu0 %v53
  %67 = vmatprep.subr.bf16.mxu0 0
  %68 = vmatpush1.bf16.msra.mxu0 %v54
  %69 = vmatprep.subr.bf16.mxu0 0
  %70 = vmatpush1.bf16.msra.mxu0 %v55
  %71 = vmatprep.subr.bf16.mxu0 0
  %72 = vmatpush1.bf16.msra.mxu0 %v56
  %73 = vmatprep.subr.bf16.mxu0 0
  %74 = vmatpush1.bf16.msra.mxu0 0
  %75 = vmatprep.subr.bf16.mxu0 0
  %76 = vmatpush1.bf16.msra.mxu0 0
  %77 = vmatprep.subr.bf16.mxu0 0
  %78 = vmatpush1.bf16.msra.mxu0 0
  %79 = vmatprep.subr.bf16.mxu0 0
  %80 = vmatpush1.bf16.msra.mxu0 0
  %81 = vmatprep.subr.bf16.mxu0 0
  %82 = vmatpush1.bf16.msra.mxu0 0
  %83 = vmatprep.subr.bf16.mxu0 0
  %84 = vmatpush1.bf16.msra.mxu0 0
  %85 = vmatprep.subr.bf16.mxu0 0
  %86 = vmatpush1.bf16.msra.mxu0 0
  %87 = vmatprep.subr.bf16.mxu0 0
  %88 = vmatpush1.bf16.msra.mxu0 0
  %89 = vmatprep.subr.bf16.mxu0 0
  %90 = vmatpush1.bf16.msra.mxu0 0
  %91 = vmatprep.subr.bf16.mxu0 0
  %92 = vmatpush1.bf16.msra.mxu0 0
  %93 = vmatprep.subr.bf16.mxu0 0
  %94 = vmatpush1.bf16.msra.mxu0 0
  %95 = vmatprep.subr.bf16.mxu0 0
  %96 = vmatpush1.bf16.msra.mxu0 0
  %97 = vmatprep.mubr.bf16.mxu0 0
  %98 = vmatmul.mubr.bf16.gmra.mrb[0].mxu0 %v63
  %v99 = vpop.f32.mrb[0].mxu0
  %v100 = vadd.f32 %v30, %v99
  %v101 = vpop.f32.mrb[0].mxu0
  %v102 = vpop.f32.mrb[0].mxu0
  %v103 = vadd.f32 %v30, %v102
  %v104 = vpop.f32.mrb[0].mxu0
  %105 = vdwg.mxu0
  %v106 = vpack.c.bf16 %v103, %v100
  %v108 = vunpack.c.l.b16 %v106
  %v109 = vunpack.c.h.b16 %v106
  %v110 = vpack.c.b16 %v108, %v108
  %v111 = vpack.c.b16 %v109, %v109
  %114 = vst [vmem:[%s3] sm:$0xf] %v110
  %115 = vst [vmem:[%s3 + $0x4] sm:$0xf] %v111
  // Predicated region
  $region14: #{upconv_forward.3} parent=0 // pred_check
    _
  $region15: #{upconv_forward.3} parent=0 // pred_check_branch
    %117 = sbr.rel (0) target = $region17
  $region16: #{upconv_forward.3} parent=0 // pred_region
    _
  $region17: #{upconv_forward.3} parent=0 // pred_fallthru
    _
  // Predicated region
  $region18: #{upconv_forward.3} parent=0 // pred_check
    _
  $region19: #{upconv_forward.3} parent=0 // pred_check_branch
    %119 = sbr.rel (0) target = $region21
  $region20: #{upconv_forward.3} parent=0 // pred_region
    _
  $region21: #{upconv_forward.3} parent=0 // pred_fallthru
    _

// kernel: tile.26
$region0: #{tile.26}
  #allocation0 [shape = 's32[1]{0}', space=sflag, size = 0x4, scoped, tag = 'scoped memory for tile.26']
  %s0 = inlined_call_operand.vmem [shape: f32[8], index: 0, kind: input, shape index: {}]
  %s1 = inlined_call_operand.vmem [shape: f32[16,8], index: 1, kind: output, shape index: {}]
  // Predicated region
  $region2: #{tile.26} parent=0 // pred_check
    _
  $region3: #{tile.26} parent=0 // pred_check_branch
    %3 = sbr.rel (0) target = $region5
  $region4: #{tile.26} parent=0 // pred_region
    _
  $region5: #{tile.26} parent=0 // pred_fallthru
    _
  %v4 = vld [vmem:[%s0] ss:$0 sm:$0xff]
  %5 = vst [vmem:[%s1] sm:$0xff] %v4
  %s6 = scalar_lea.vmem %s1, 8
  %7 = vst [vmem:[%s6] sm:$0xff] %v4

// kernel: tile.27
$region0: #{tile.27}
  %s0 = inlined_call_operand.vmem [shape: f32[16,8], index: 0, kind: input, shape index: {}]
  %s1 = inlined_call_operand.vmem [shape: f32[1,128], index: 1, kind: output, shape index: {}]
  $region1: #{tile.27} parent=0
    #allocation0 [shape = 'u8[4096]{0}', space=vmem, size = 0x1000, scoped, tag = 'scoped mem for output reshape']
    %v2 = vld [vmem:[%s0] sm:$0x1]
    %vm3 = vcmask 64512
    %4 = vst.msk [vmem:[#allocation0] sm:$0x1] %vm3, %v2
    %s5 = scalar_lea.vmem %s0, 15
    %v6 = vld [vmem:[%s5] sm:$0x1]
    %7 = vrot.lane.b32.xlu0 %v6, 120
    %v8 = vpop.permute.xlu0 %7
    %vm9 = vcmask 1048512
    %10 = vst.msk [vmem:[#allocation0] sm:$0x1] %vm9, %v8
    %s11 = scalar_lea.vmem %s0, 14
    %v12 = vld [vmem:[%s11] sm:$0x1]
    %13 = vrot.lane.b32.xlu0 %v12, 112
    %v14 = vpop.permute.xlu0 %13
    %vm15 = vcmask 982912
    %16 = vst.msk [vmem:[#allocation0] sm:$0x1] %vm15, %v14
    %s17 = scalar_lea.vmem %s0, 13
    %v18 = vld [vmem:[%s17] sm:$0x1]
    %19 = vrot.lane.b32.xlu0 %v18, 104
    %v20 = vpop.permute.xlu0 %19
    %vm21 = vcmask 917312
    %22 = vst.msk [vmem:[#allocation0] sm:$0x1] %vm21, %v20
    %s23 = scalar_lea.vmem %s0, 12
    %v24 = vld [vmem:[%s23] sm:$0x1]
    %25 = vrot.lane.b32.xlu0 %v24, 96
    %v26 = vpop.permute.xlu0 %25
    %vm27 = vcmask 851712
    %28 = vst.msk [vmem:[#allocation0] sm:$0x1] %vm27, %v26
    %s29 = scalar_lea.vmem %s0, 11
    %v30 = vld [vmem:[%s29] sm:$0x1]
    %31 = vrot.lane.b32.xlu0 %v30, 88
    %v32 = vpop.permute.xlu0 %31
    %vm33 = vcmask 786112
    %34 = vst.msk [vmem:[#allocation0] sm:$0x1] %vm33, %v32
    %s35 = scalar_lea.vmem %s0, 10
    %v36 = vld [vmem:[%s35] sm:$0x1]
    %37 = vrot.lane.b32.xlu0 %v36, 80
    %v38 = vpop.permute.xlu0 %37
    %vm39 = vcmask 720512
    %40 = vst.msk [vmem:[#allocation0] sm:$0x1] %vm39, %v38
    %s41 = scalar_lea.vmem %s0, 9
    %v42 = vld [vmem:[%s41] sm:$0x1]
    %43 = vrot.lane.b32.xlu0 %v42, 72
    %v44 = vpop.permute.xlu0 %43
    %vm45 = vcmask 654912
    %46 = vst.msk [vmem:[#allocation0] sm:$0x1] %vm45, %v44
    %s47 = scalar_lea.vmem %s0, 8
    %v48 = vld [vmem:[%s47] sm:$0x1]
    %49 = vrot.lane.b32.xlu0 %v48, 64
    %v50 = vpop.permute.xlu0 %49
    %vm51 = vcmask 589312
    %52 = vst.msk [vmem:[#allocation0] sm:$0x1] %vm51, %v50
    %s53 = scalar_lea.vmem %s0, 7
    %v54 = vld [vmem:[%s53] sm:$0x1]
    %55 = vrot.lane.b32.xlu0 %v54, 56
    %v56 = vpop.permute.xlu0 %55
    %vm57 = vcmask 523712
    %58 = vst.msk [vmem:[#allocation0] sm:$0x1] %vm57, %v56
    %s59 = scalar_lea.vmem %s0, 6
    %v60 = vld [vmem:[%s59] sm:$0x1]
    %61 = vrot.lane.b32.xlu0 %v60, 48
    %v62 = vpop.permute.xlu0 %61
    %vm63 = vcmask 458112
    %64 = vst.msk [vmem:[#allocation0] sm:$0x1] %vm63, %v62
    %s65 = scalar_lea.vmem %s0, 5
    %v66 = vld [vmem:[%s65] sm:$0x1]
    %67 = vrot.lane.b32.xlu0 %v66, 40
    %v68 = vpop.permute.xlu0 %67
    %vm69 = vcmask 392512
    %70 = vst.msk [vmem:[#allocation0] sm:$0x1] %vm69, %v68
    %s71 = scalar_lea.vmem %s0, 4
    %v72 = vld [vmem:[%s71] sm:$0x1]
    %73 = vrot.lane.b32.xlu0 %v72, 32
    %v74 = vpop.permute.xlu0 %73
    %vm75 = vcmask 326912
    %76 = vst.msk [vmem:[#allocation0] sm:$0x1] %vm75, %v74
    %s77 = scalar_lea.vmem %s0, 3
    %v78 = vld [vmem:[%s77] sm:$0x1]
    %79 = vrot.lane.b32.xlu0 %v78, 24
    %v80 = vpop.permute.xlu0 %79
    %vm81 = vcmask 261312
    %82 = vst.msk [vmem:[#allocation0] sm:$0x1] %vm81, %v80
    %s83 = scalar_lea.vmem %s0, 2
    %v84 = vld [vmem:[%s83] sm:$0x1]
    %85 = vrot.lane.b32.xlu0 %v84, 16
    %v86 = vpop.permute.xlu0 %85
    %vm87 = vcmask 195712
    %88 = vst.msk [vmem:[#allocation0] sm:$0x1] %vm87, %v86
    %s89 = scalar_lea.vmem %s0, 1
    %v90 = vld [vmem:[%s89] sm:$0x1]
    %91 = vrot.lane.b32.xlu0 %v90, 8
    %v92 = vpop.permute.xlu0 %91
    %vm93 = vcmask 130112
    %94 = vst.msk [vmem:[#allocation0] sm:$0x1] %vm93, %v92
    %s96 = sshllo.u32 0, 1
    %v98 = vld [vmem:[#allocation0] sm:%s96]
    %s99 = sshllo.u32 0, 1
    %100 = vst [vmem:[%s1] sm:%s99] %v98

// kernel: upconv_forward.4
$region0: #{upconv_forward.4}
  #allocation0 [shape = 'u32[]', space=smem, size = 0x4, offset = 0x4, fixed_abs, tag = 'smem constant byte address 0x4 - core index']
  #allocation1 [shape = 'u32[144,128]{1,0:T(1,128)}', space=vmem, size = 0x12000, scoped, tag = 'internal scratch']
  %s0 = inlined_call_operand.vmem [shape: bf16[32,64], index: 0, kind: input, shape index: {}]
  %s1 = inlined_call_operand.vmem [shape: bf16[32,64], index: 1, kind: input, shape index: {}]
  %s2 = inlined_call_operand.vmem [shape: bf16[3,64,128], index: 2, kind: input, shape index: {}]
  %s3 = inlined_call_operand.vmem [shape: bf16[3,64,128], index: 3, kind: input, shape index: {}]
  %s4 = inlined_call_operand.vmem [shape: bf16[32,128], index: 4, kind: output, shape index: {0}]
  %s5 = inlined_call_operand.vmem [shape: f32[1,1,128], index: 5, kind: output, shape index: {1}]
  %s6 = inlined_call_operand.vmem [shape: f32[1,1,128], index: 6, kind: output, shape index: {2}]
  %7 = xla_tuple %s4, %s5, %s6
  %s8 = sld [smem:[#allocation0]]
  $region42: #{upconv_forward.4} parent=0
    _
  %s10 = ssub.s32 1, %s8
  %s11 = scalar_select 0, %s10, %s8
  // Predicated region
  $region2: #{upconv_forward.4} parent=0 // pred_check
    _
  $region3: #{upconv_forward.4} parent=0 // pred_check_branch
    %13 = sbr.rel (0) target = $region5
  $region4: #{upconv_forward.4} parent=0 // pred_region
    _
  $region5: #{upconv_forward.4} parent=0 // pred_fallthru
    _
  // Predicated region
  $region6: #{upconv_forward.4} parent=0 // pred_check
    _
  $region7: #{upconv_forward.4} parent=0 // pred_check_branch
    %15 = sbr.rel (0) target = $region9
  $region8: #{upconv_forward.4} parent=0 // pred_region
    _
  $region9: #{upconv_forward.4} parent=0 // pred_fallthru
    _
  // Predicated region
  $region10: #{upconv_forward.4} parent=0 // pred_check
    _
  $region11: #{upconv_forward.4} parent=0 // pred_check_branch
    %17 = sbr.rel (0) target = $region13
  $region12: #{upconv_forward.4} parent=0 // pred_region
    _
  $region13: #{upconv_forward.4} parent=0 // pred_fallthru
    _
  // Predicated region
  $region14: #{upconv_forward.4} parent=0 // pred_check
    _
  $region15: #{upconv_forward.4} parent=0 // pred_check_branch
    %19 = sbr.rel (0) target = $region17
  $region16: #{upconv_forward.4} parent=0 // pred_region
    _
  $region17: #{upconv_forward.4} parent=0 // pred_fallthru
    _
  %v21 = vld [vmem:[%s0] sm:$0xf]
  %v22 = vld [vmem:[%s0 + $0x4] sm:$0xf]
  %v23 = vld [vmem:[%s0 + $0x8] sm:$0xf]
  %v24 = vld [vmem:[%s0 + $0xc] sm:$0xf]
  %s25 = scalar_lea.vmem %s2, 32
  %v26 = vld [vmem:[%s25] sm:$0xf]
  %v27 = vld [vmem:[%s25 + $0x4] sm:$0xf]
  %v28 = vld [vmem:[%s25 + $0x8] sm:$0xf]
  %v29 = vld [vmem:[%s25 + $0xc] sm:$0xf]
  %v30 = vld [vmem:[%s25 + $0x10] sm:$0xf]
  %v31 = vld [vmem:[%s25 + $0x14] sm:$0xf]
  %v32 = vld [vmem:[%s25 + $0x18] sm:$0xf]
  %v33 = vld [vmem:[%s25 + $0x1c] sm:$0xf]
  %v34 = vld [vmem:[%s2] sm:$0xf]
  %v35 = vld [vmem:[%s2 + $0x4] sm:$0xf]
  %v36 = vld [vmem:[%s2 + $0x8] sm:$0xf]
  %v37 = vld [vmem:[%s2 + $0xc] sm:$0xf]
  %v38 = vld [vmem:[%s2 + $0x10] sm:$0xf]
  %v39 = vld [vmem:[%s2 + $0x14] sm:$0xf]
  %v40 = vld [vmem:[%s2 + $0x18] sm:$0xf]
  %v41 = vld [vmem:[%s2 + $0x1c] sm:$0xf]
  %v46 = vunpack.c.l.b16 %v21
  %v47 = vunpack.c.l.b16 %v22
  %v48 = vunpack.c.l.b16 %v23
  %v49 = vunpack.c.l.b16 %v24
  %v50 = vpack.c.b16 %v47, %v46
  %v51 = vpack.c.b16 %v49, %v48
  %v60 = vunpack.c.l.b16 %v34
  %v61 = vunpack.c.l.b16 %v35
  %v62 = vunpack.c.l.b16 %v36
  %v63 = vunpack.c.l.b16 %v37
  %v64 = vunpack.c.l.b16 %v38
  %v65 = vunpack.c.l.b16 %v39
  %v66 = vunpack.c.l.b16 %v40
  %v67 = vunpack.c.l.b16 %v41
  %v68 = vpack.c.b16 %v61, %v60
  %v69 = vpack.c.b16 %v63, %v62
  %v70 = vpack.c.b16 %v65, %v64
  %v71 = vpack.c.b16 %v67, %v66
  %vm76 = vcmask 523264
  %v78 = vsel %vm76, %v50, 0
  %v81 = vsel %vm76, %v51, 0
  %83 = vmatprep.subr.bf16.mxu0 0
  %84 = vmatpush1.bf16.msra.mxu0 %v68
  %85 = vmatprep.subr.bf16.mxu0 0
  %86 = vmatpush1.bf16.msra.mxu0 %v69
  %87 = vmatprep.subr.bf16.mxu0 0
  %88 = vmatpush1.bf16.msra.mxu0 %v70
  %89 = vmatprep.subr.bf16.mxu0 0
  %90 = vmatpush1.bf16.msra.mxu0 %v71
  %91 = vmatprep.subr.bf16.mxu0 0
  %92 = vmatpush1.bf16.msra.mxu0 0
  %93 = vmatprep.subr.bf16.mxu0 0
  %94 = vmatpush1.bf16.msra.mxu0 0
  %95 = vmatprep.subr.bf16.mxu0 0
  %96 = vmatpush1.bf16.msra.mxu0 0
  %97 = vmatprep.subr.bf16.mxu0 0
  %98 = vmatpush1.bf16.msra.mxu0 0
  %99 = vmatprep.subr.bf16.mxu0 0
  %100 = vmatpush1.bf16.msra.mxu0 0
  %101 = vmatprep.subr.bf16.mxu0 0
  %102 = vmatpush1.bf16.msra.mxu0 0
  %103 = vmatprep.subr.bf16.mxu0 0
  %104 = vmatpush1.bf16.msra.mxu0 0
  %105 = vmatprep.subr.bf16.mxu0 0
  %106 = vmatpush1.bf16.msra.mxu0 0
  %107 = vmatprep.subr.bf16.mxu0 0
  %108 = vmatpush1.bf16.msra.mxu0 0
  %109 = vmatprep.subr.bf16.mxu0 0
  %110 = vmatpush1.bf16.msra.mxu0 0
  %111 = vmatprep.subr.bf16.mxu0 0
  %112 = vmatpush1.bf16.msra.mxu0 0
  %113 = vmatprep.subr.bf16.mxu0 0
  %114 = vmatpush1.bf16.msra.mxu0 0
  %115 = vmatprep.mubr.bf16.mxu0 0
  %116 = vmatmul.mubr.bf16.gmra.mrb[0].mxu0 %v78
  %v117 = vpop.f32.mrb[0].mxu0
  %v118 = vadd.f32 0.0, %v117
  %v119 = vpop.f32.mrb[0].mxu0
  %v120 = vpop.f32.mrb[0].mxu0
  %v121 = vadd.f32 0.0, %v120
  %v122 = vpop.f32.mrb[0].mxu0
  %123 = vmatprep.mubr.bf16.mxu0 0
  %124 = vmatmul.mubr.bf16.gmra.mrb[0].mxu0 %v81
  %v125 = vpop.f32.mrb[0].mxu0
  %v126 = vadd.f32 0.0, %v125
  %v127 = vpop.f32.mrb[0].mxu0
  %v128 = vpop.f32.mrb[0].mxu0
  %v129 = vadd.f32 0.0, %v128
  %v130 = vpop.f32.mrb[0].mxu0
  %131 = vdwg.mxu0
  %s132 = scalar_lea.vmem %s2, 64
  %v133 = vld [vmem:[%s132] sm:$0xf]
  %v134 = vld [vmem:[%s132 + $0x4] sm:$0xf]
  %v135 = vld [vmem:[%s132 + $0x8] sm:$0xf]
  %v136 = vld [vmem:[%s132 + $0xc] sm:$0xf]
  %v137 = vld [vmem:[%s132 + $0x10] sm:$0xf]
  %v138 = vld [vmem:[%s132 + $0x14] sm:$0xf]
  %v139 = vld [vmem:[%s132 + $0x18] sm:$0xf]
  %v140 = vld [vmem:[%s132 + $0x1c] sm:$0xf]
  %v149 = vunpack.c.l.b16 %v133
  %v150 = vunpack.c.l.b16 %v134
  %v151 = vunpack.c.l.b16 %v135
  %v152 = vunpack.c.l.b16 %v136
  %v153 = vunpack.c.l.b16 %v137
  %v154 = vunpack.c.l.b16 %v138
  %v155 = vunpack.c.l.b16 %v139
  %v156 = vunpack.c.l.b16 %v140
  %v157 = vpack.c.b16 %v150, %v149
  %v158 = vpack.c.b16 %v152, %v151
  %v159 = vpack.c.b16 %v154, %v153
  %v160 = vpack.c.b16 %v156, %v155
  %165 = vmatprep.subr.bf16.mxu0 0
  %166 = vmatpush1.bf16.msra.mxu0 %v157
  %167 = vmatprep.subr.bf16.mxu0 0
  %168 = vmatpush1.bf16.msra.mxu0 %v158
  %169 = vmatprep.subr.bf16.mxu0 0
  %170 = vmatpush1.bf16.msra.mxu0 %v159
  %171 = vmatprep.subr.bf16.mxu0 0
  %172 = vmatpush1.bf16.msra.mxu0 %v160
  %173 = vmatprep.subr.bf16.mxu0 0
  %174 = vmatpush1.bf16.msra.mxu0 0
  %175 = vmatprep.subr.bf16.mxu0 0
  %176 = vmatpush1.bf16.msra.mxu0 0
  %177 = vmatprep.subr.bf16.mxu0 0
  %178 = vmatpush1.bf16.msra.mxu0 0
  %179 = vmatprep.subr.bf16.mxu0 0
  %180 = vmatpush1.bf16.msra.mxu0 0
  %181 = vmatprep.subr.bf16.mxu0 0
  %182 = vmatpush1.bf16.msra.mxu0 0
  %183 = vmatprep.subr.bf16.mxu0 0
  %184 = vmatpush1.bf16.msra.mxu0 0
  %185 = vmatprep.subr.bf16.mxu0 0
  %186 = vmatpush1.bf16.msra.mxu0 0
  %187 = vmatprep.subr.bf16.mxu0 0
  %188 = vmatpush1.bf16.msra.mxu0 0
  %189 = vmatprep.subr.bf16.mxu0 0
  %190 = vmatpush1.bf16.msra.mxu0 0
  %191 = vmatprep.subr.bf16.mxu0 0
  %192 = vmatpush1.bf16.msra.mxu0 0
  %193 = vmatprep.subr.bf16.mxu0 0
  %194 = vmatpush1.bf16.msra.mxu0 0
  %195 = vmatprep.subr.bf16.mxu0 0
  %196 = vmatpush1.bf16.msra.mxu0 0
  %197 = vmatprep.mubr.bf16.mxu0 0
  %198 = vmatmul.mubr.bf16.gmra.mrb[0].mxu0 %v78
  %v199 = vpop.f32.mrb[0].mxu0
  %v200 = vadd.f32 0.0, %v199
  %v201 = vpop.f32.mrb[0].mxu0
  %v202 = vpop.f32.mrb[0].mxu0
  %v203 = vadd.f32 0.0, %v202
  %v204 = vpop.f32.mrb[0].mxu0
  %205 = vmatprep.mubr.bf16.mxu0 0
  %206 = vmatmul.mubr.bf16.gmra.mrb[0].mxu0 %v81
  %v207 = vpop.f32.mrb[0].mxu0
  %v208 = vadd.f32 0.0, %v207
  %v209 = vpop.f32.mrb[0].mxu0
  %v210 = vpop.f32.mrb[0].mxu0
  %v211 = vadd.f32 0.0, %v210
  %v212 = vpop.f32.mrb[0].mxu0
  %213 = vdwg.mxu0
  %v214 = vlaneseq
  %v215 = vshrl.u32 %v214, 7
  %v216 = vadd.s32 %v215, 8
  %v217 = vadd.s32 %v215, 16
  %v218 = vadd.s32 %v215, 24
  %vm219 = vcmp.lt.s32.totalorder %v215, 0
  %v220 = vsub.s32 0, %v215
  %v221 = vsel %vm219, %v220, %v215
  %v222 = vshrl.u32 %v221, 4
  %v223 = vand.u32 %v221, 15
  %v224 = vsub.s32 0, %v223
  %v225 = vsel %vm219, %v224, %v223
  %vm226 = vcmp.lt.s32.totalorder %v216, 0
  %v227 = vsub.s32 0, %v216
  %v228 = vsel %vm226, %v227, %v216
  %v229 = vshrl.u32 %v228, 4
  %v230 = vand.u32 %v228, 15
  %v231 = vsub.s32 0, %v230
  %v232 = vsel %vm226, %v231, %v230
  %vm233 = vcmp.lt.s32.totalorder %v217, 0
  %v234 = vsub.s32 0, %v217
  %v235 = vsel %vm233, %v234, %v217
  %v236 = vshrl.u32 %v235, 4
  %v237 = vand.u32 %v235, 15
  %v238 = vsub.s32 0, %v237
  %v239 = vsel %vm233, %v238, %v237
  %vm240 = vcmp.lt.s32.totalorder %v218, 0
  %v241 = vsub.s32 0, %v218
  %v242 = vsel %vm240, %v241, %v218
  %v243 = vshrl.u32 %v242, 4
  %v244 = vand.u32 %v242, 15
  %v245 = vsub.s32 0, %v244
  %v246 = vsel %vm240, %v245, %v244
  %vm247 = vcmp.ne.s32.totalorder %v225, 0
  %vm248 = vcmp.ne.s32.totalorder %v232, 0
  %vm249 = vcmp.ne.s32.totalorder %v239, 0
  %vm250 = vcmp.ne.s32.totalorder %v246, 0
  %vm251 = vcmp.lt.s32.totalorder %v225, 0
  %vm252 = vcmp.lt.s32.totalorder %v232, 0
  %vm253 = vcmp.lt.s32.totalorder %v239, 0
  %vm254 = vcmp.lt.s32.totalorder %v246, 0
  %vm255 = vmand %vm251, %vm247
  %vm256 = vmand %vm252, %vm248
  %vm257 = vmand %vm253, %vm249
  %vm258 = vmand %vm254, %vm250
  %v259 = vadd.s32 %v225, 16
  %v260 = vadd.s32 %v232, 16
  %v261 = vadd.s32 %v239, 16
  %v262 = vadd.s32 %v246, 16
  %v263 = vsel %vm255, %v259, %v225
  %v264 = vsel %vm256, %v260, %v232
  %v265 = vsel %vm257, %v261, %v239
  %v266 = vsel %vm258, %v262, %v246
  %v267 = vrot.slane %v118, 7
  %v268 = vrot.slane %v121, 7
  %v269 = vrot.slane %v126, 7
  %v270 = vrot.slane %v129, 7
  %vm271 = vcmp.lt.s32.totalorder %v215, 1
  %v272 = vsel %vm271, %v269, %v270
  %v273 = vsel %vm271, %v268, %v269
  %v274 = vsel %vm271, %v267, %v268
  %v275 = vsel %vm271, %v270, %v267
  %v276 = vrot.slane %v200, 1
  %v277 = vrot.slane %v203, 1
  %v278 = vrot.slane %v208, 1
  %v279 = vrot.slane %v211, 1
  %vm280 = vcmp.lt.s32.totalorder %v215, 7
  %v281 = vsel %vm280, %v278, %v279
  %v282 = vsel %vm280, %v277, %v278
  %v283 = vsel %vm280, %v276, %v277
  %v284 = vsel %vm280, %v279, %v276
  %vm285 = vcmp.eq.s32.totalorder %v263, 0
  %vm286 = vcmp.eq.s32.totalorder %v264, 0
  %vm287 = vcmp.eq.s32.totalorder %v265, 0
  %vm288 = vcmp.eq.s32.totalorder %v266, 0
  %v289 = vsel %vm285, 0.0, %v275
  %v290 = vsel %vm286, 0.0, %v274
  %v291 = vsel %vm287, 0.0, %v273
  %v292 = vsel %vm288, 0.0, %v272
  %v301 = vunpack.c.l.b16 %v26
  %v302 = vunpack.c.l.b16 %v27
  %v303 = vunpack.c.l.b16 %v28
  %v304 = vunpack.c.l.b16 %v29
  %v305 = vunpack.c.l.b16 %v30
  %v306 = vunpack.c.l.b16 %v31
  %v307 = vunpack.c.l.b16 %v32
  %v308 = vunpack.c.l.b16 %v33
  %v309 = vpack.c.b16 %v302, %v301
  %v310 = vpack.c.b16 %v304, %v303
  %v311 = vpack.c.b16 %v306, %v305
  %v312 = vpack.c.b16 %v308, %v307
  %317 = vmatprep.subr.bf16.mxu0 0
  %318 = vmatpush1.bf16.msra.mxu0 %v309
  %319 = vmatprep.subr.bf16.mxu0 0
  %320 = vmatpush1.bf16.msra.mxu0 %v310
  %321 = vmatprep.subr.bf16.mxu0 0
  %322 = vmatpush1.bf16.msra.mxu0 %v311
  %323 = vmatprep.subr.bf16.mxu0 0
  %324 = vmatpush1.bf16.msra.mxu0 %v312
  %325 = vmatprep.subr.bf16.mxu0 0
  %326 = vmatpush1.bf16.msra.mxu0 0
  %327 = vmatprep.subr.bf16.mxu0 0
  %328 = vmatpush1.bf16.msra.mxu0 0
  %329 = vmatprep.subr.bf16.mxu0 0
  %330 = vmatpush1.bf16.msra.mxu0 0
  %331 = vmatprep.subr.bf16.mxu0 0
  %332 = vmatpush1.bf16.msra.mxu0 0
  %333 = vmatprep.subr.bf16.mxu0 0
  %334 = vmatpush1.bf16.msra.mxu0 0
  %335 = vmatprep.subr.bf16.mxu0 0
  %336 = vmatpush1.bf16.msra.mxu0 0
  %337 = vmatprep.subr.bf16.mxu0 0
  %338 = vmatpush1.bf16.msra.mxu0 0
  %339 = vmatprep.subr.bf16.mxu0 0
  %340 = vmatpush1.bf16.msra.mxu0 0
  %341 = vmatprep.subr.bf16.mxu0 0
  %342 = vmatpush1.bf16.msra.mxu0 0
  %343 = vmatprep.subr.bf16.mxu0 0
  %344 = vmatpush1.bf16.msra.mxu0 0
  %345 = vmatprep.subr.bf16.mxu0 0
  %346 = vmatpush1.bf16.msra.mxu0 0
  %347 = vmatprep.subr.bf16.mxu0 0
  %348 = vmatpush1.bf16.msra.mxu0 0
  %349 = vmatprep.mubr.bf16.mxu0 0
  %350 = vmatmul.mubr.bf16.gmra.mrb[0].mxu0 %v78
  %v351 = vpop.f32.mrb[0].mxu0
  %v352 = vadd.f32 %v289, %v351
  %v353 = vpop.f32.mrb[0].mxu0
  %v354 = vpop.f32.mrb[0].mxu0
  %v355 = vadd.f32 %v290, %v354
  %v356 = vpop.f32.mrb[0].mxu0
  %357 = vmatprep.mubr.bf16.mxu0 0
  %358 = vmatmul.mubr.bf16.gmra.mrb[0].mxu0 %v81
  %v359 = vpop.f32.mrb[0].mxu0
  %v360 = vadd.f32 %v291, %v359
  %v361 = vpop.f32.mrb[0].mxu0
  %v362 = vpop.f32.mrb[0].mxu0
  %v363 = vadd.f32 %v292, %v362
  %v364 = vpop.f32.mrb[0].mxu0
  %365 = vdwg.mxu0
  %vm366 = vcmp.eq.s32.totalorder %v263, 15
  %vm367 = vcmp.eq.s32.totalorder %v264, 15
  %vm368 = vcmp.eq.s32.totalorder %v265, 15
  %vm369 = vcmp.eq.s32.totalorder %v266, 15
  %v370 = vsel %vm366, 0.0, %v283
  %v371 = vsel %vm367, 0.0, %v282
  %v372 = vsel %vm368, 0.0, %v281
  %v373 = vsel %vm369, 0.0, %v284
  %v374 = vadd.f32 %v352, %v370
  %v375 = vadd.f32 %v355, %v371
  %v376 = vadd.f32 %v360, %v372
  %v377 = vadd.f32 %v363, %v373
  %v378 = vld [vmem:[%s1] sm:$0xf]
  %v379 = vld [vmem:[%s1 + $0x4] sm:$0xf]
  %v380 = vld [vmem:[%s1 + $0x8] sm:$0xf]
  %v381 = vld [vmem:[%s1 + $0xc] sm:$0xf]
  %s382 = scalar_lea.vmem %s3, 32
  %v383 = vld [vmem:[%s382] sm:$0xf]
  %v384 = vld [vmem:[%s382 + $0x4] sm:$0xf]
  %v385 = vld [vmem:[%s382 + $0x8] sm:$0xf]
  %v386 = vld [vmem:[%s382 + $0xc] sm:$0xf]
  %v387 = vld [vmem:[%s382 + $0x10] sm:$0xf]
  %v388 = vld [vmem:[%s382 + $0x14] sm:$0xf]
  %v389 = vld [vmem:[%s382 + $0x18] sm:$0xf]
  %v390 = vld [vmem:[%s382 + $0x1c] sm:$0xf]
  %v391 = vld [vmem:[%s3] sm:$0xf]
  %v392 = vld [vmem:[%s3 + $0x4] sm:$0xf]
  %v393 = vld [vmem:[%s3 + $0x8] sm:$0xf]
  %v394 = vld [vmem:[%s3 + $0xc] sm:$0xf]
  %v395 = vld [vmem:[%s3 + $0x10] sm:$0xf]
  %v396 = vld [vmem:[%s3 + $0x14] sm:$0xf]
  %v397 = vld [vmem:[%s3 + $0x18] sm:$0xf]
  %v398 = vld [vmem:[%s3 + $0x1c] sm:$0xf]
  %v403 = vunpack.c.l.b16 %v378
  %v404 = vunpack.c.l.b16 %v379
  %v405 = vunpack.c.l.b16 %v380
  %v406 = vunpack.c.l.b16 %v381
  %v407 = vpack.c.b16 %v404, %v403
  %v408 = vpack.c.b16 %v406, %v405
  %v417 = vunpack.c.l.b16 %v391
  %v418 = vunpack.c.l.b16 %v392
  %v419 = vunpack.c.l.b16 %v393
  %v420 = vunpack.c.l.b16 %v394
  %v421 = vunpack.c.l.b16 %v395
  %v422 = vunpack.c.l.b16 %v396
  %v423 = vunpack.c.l.b16 %v397
  %v424 = vunpack.c.l.b16 %v398
  %v425 = vpack.c.b16 %v418, %v417
  %v426 = vpack.c.b16 %v420, %v419
  %v427 = vpack.c.b16 %v422, %v421
  %v428 = vpack.c.b16 %v424, %v423
  %v434 = vsel %vm76, %v407, 0
  %v437 = vsel %vm76, %v408, 0
  %439 = vmatprep.subr.bf16.mxu0 0
  %440 = vmatpush1.bf16.msra.mxu0 %v425
  %441 = vmatprep.subr.bf16.mxu0 0
  %442 = vmatpush1.bf16.msra.mxu0 %v426
  %443 = vmatprep.subr.bf16.mxu0 0
  %444 = vmatpush1.bf16.msra.mxu0 %v427
  %445 = vmatprep.subr.bf16.mxu0 0
  %446 = vmatpush1.bf16.msra.mxu0 %v428
  %447 = vmatprep.subr.bf16.mxu0 0
  %448 = vmatpush1.bf16.msra.mxu0 0
  %449 = vmatprep.subr.bf16.mxu0 0
  %450 = vmatpush1.bf16.msra.mxu0 0
  %451 = vmatprep.subr.bf16.mxu0 0
  %452 = vmatpush1.bf16.msra.mxu0 0
  %453 = vmatprep.subr.bf16.mxu0 0
  %454 = vmatpush1.bf16.msra.mxu0 0
  %455 = vmatprep.subr.bf16.mxu0 0
  %456 = vmatpush1.bf16.msra.mxu0 0
  %457 = vmatprep.subr.bf16.mxu0 0
  %458 = vmatpush1.bf16.msra.mxu0 0
  %459 = vmatprep.subr.bf16.mxu0 0
  %460 = vmatpush1.bf16.msra.mxu0 0
  %461 = vmatprep.subr.bf16.mxu0 0
  %462 = vmatpush1.bf16.msra.mxu0 0
  %463 = vmatprep.subr.bf16.mxu0 0
  %464 = vmatpush1.bf16.msra.mxu0 0
  %465 = vmatprep.subr.bf16.mxu0 0
  %466 = vmatpush1.bf16.msra.mxu0 0
  %467 = vmatprep.subr.bf16.mxu0 0
  %468 = vmatpush1.bf16.msra.mxu0 0
  %469 = vmatprep.subr.bf16.mxu0 0
  %470 = vmatpush1.bf16.msra.mxu0 0
  %471 = vmatprep.mubr.bf16.mxu0 0
  %472 = vmatmul.mubr.bf16.gmra.mrb[0].mxu0 %v434
  %v473 = vpop.f32.mrb[0].mxu0
  %v474 = vadd.f32 0.0, %v473
  %v475 = vpop.f32.mrb[0].mxu0
  %v476 = vpop.f32.mrb[0].mxu0
  %v477 = vadd.f32 0.0, %v476
  %v478 = vpop.f32.mrb[0].mxu0
  %479 = vmatprep.mubr.bf16.mxu0 0
  %480 = vmatmul.mubr.bf16.gmra.mrb[0].mxu0 %v437
  %v481 = vpop.f32.mrb[0].mxu0
  %v482 = vadd.f32 0.0, %v481
  %v483 = vpop.f32.mrb[0].mxu0
  %v484 = vpop.f32.mrb[0].mxu0
  %v485 = vadd.f32 0.0, %v484
  %v486 = vpop.f32.mrb[0].mxu0
  %487 = vdwg.mxu0
  %s488 = scalar_lea.vmem %s3, 64
  %v489 = vld [vmem:[%s488] sm:$0xf]
  %v490 = vld [vmem:[%s488 + $0x4] sm:$0xf]
  %v491 = vld [vmem:[%s488 + $0x8] sm:$0xf]
  %v492 = vld [vmem:[%s488 + $0xc] sm:$0xf]
  %v493 = vld [vmem:[%s488 + $0x10] sm:$0xf]
  %v494 = vld [vmem:[%s488 + $0x14] sm:$0xf]
  %v495 = vld [vmem:[%s488 + $0x18] sm:$0xf]
  %v496 = vld [vmem:[%s488 + $0x1c] sm:$0xf]
  %v505 = vunpack.c.l.b16 %v489
  %v506 = vunpack.c.l.b16 %v490
  %v507 = vunpack.c.l.b16 %v491
  %v508 = vunpack.c.l.b16 %v492
  %v509 = vunpack.c.l.b16 %v493
  %v510 = vunpack.c.l.b16 %v494
  %v511 = vunpack.c.l.b16 %v495
  %v512 = vunpack.c.l.b16 %v496
  %v513 = vpack.c.b16 %v506, %v505
  %v514 = vpack.c.b16 %v508, %v507
  %v515 = vpack.c.b16 %v510, %v509
  %v516 = vpack.c.b16 %v512, %v511
  %521 = vmatprep.subr.bf16.mxu0 0
  %522 = vmatpush1.bf16.msra.mxu0 %v513
  %523 = vmatprep.subr.bf16.mxu0 0
  %524 = vmatpush1.bf16.msra.mxu0 %v514
  %525 = vmatprep.subr.bf16.mxu0 0
  %526 = vmatpush1.bf16.msra.mxu0 %v515
  %527 = vmatprep.subr.bf16.mxu0 0
  %528 = vmatpush1.bf16.msra.mxu0 %v516
  %529 = vmatprep.subr.bf16.mxu0 0
  %530 = vmatpush1.bf16.msra.mxu0 0
  %531 = vmatprep.subr.bf16.mxu0 0
  %532 = vmatpush1.bf16.msra.mxu0 0
  %533 = vmatprep.subr.bf16.mxu0 0
  %534 = vmatpush1.bf16.msra.mxu0 0
  %535 = vmatprep.subr.bf16.mxu0 0
  %536 = vmatpush1.bf16.msra.mxu0 0
  %537 = vmatprep.subr.bf16.mxu0 0
  %538 = vmatpush1.bf16.msra.mxu0 0
  %539 = vmatprep.subr.bf16.mxu0 0
  %540 = vmatpush1.bf16.msra.mxu0 0
  %541 = vmatprep.subr.bf16.mxu0 0
  %542 = vmatpush1.bf16.msra.mxu0 0
  %543 = vmatprep.subr.bf16.mxu0 0
  %544 = vmatpush1.bf16.msra.mxu0 0
  %545 = vmatprep.subr.bf16.mxu0 0
  %546 = vmatpush1.bf16.msra.mxu0 0
  %547 = vmatprep.subr.bf16.mxu0 0
  %548 = vmatpush1.bf16.msra.mxu0 0
  %549 = vmatprep.subr.bf16.mxu0 0
  %550 = vmatpush1.bf16.msra.mxu0 0
  %551 = vmatprep.subr.bf16.mxu0 0
  %552 = vmatpush1.bf16.msra.mxu0 0
  %553 = vmatprep.mubr.bf16.mxu0 0
  %554 = vmatmul.mubr.bf16.gmra.mrb[0].mxu0 %v434
  %v555 = vpop.f32.mrb[0].mxu0
  %v556 = vadd.f32 0.0, %v555
  %v557 = vpop.f32.mrb[0].mxu0
  %v558 = vpop.f32.mrb[0].mxu0
  %v559 = vadd.f32 0.0, %v558
  %v560 = vpop.f32.mrb[0].mxu0
  %561 = vmatprep.mubr.bf16.mxu0 0
  %562 = vmatmul.mubr.bf16.gmra.mrb[0].mxu0 %v437
  %v563 = vpop.f32.mrb[0].mxu0
  %v564 = vadd.f32 0.0, %v563
  %v565 = vpop.f32.mrb[0].mxu0
  %v566 = vpop.f32.mrb[0].mxu0
  %v567 = vadd.f32 0.0, %v566
  %v568 = vpop.f32.mrb[0].mxu0
  %569 = vdwg.mxu0
  %v570 = vrot.slane %v474, 7
  %v571 = vrot.slane %v477, 7
  %v572 = vrot.slane %v482, 7
  %v573 = vrot.slane %v485, 7
  %v574 = vsel %vm271, %v572, %v573
  %v575 = vsel %vm271, %v571, %v572
  %v576 = vsel %vm271, %v570, %v571
  %v577 = vsel %vm271, %v573, %v570
  %v578 = vrot.slane %v556, 1
  %v579 = vrot.slane %v559, 1
  %v580 = vrot.slane %v564, 1
  %v581 = vrot.slane %v567, 1
  %v582 = vsel %vm280, %v580, %v581
  %v583 = vsel %vm280, %v579, %v580
  %v584 = vsel %vm280, %v578, %v579
  %v585 = vsel %vm280, %v581, %v578
  %v586 = vsel %vm285, 0.0, %v577
  %v587 = vsel %vm286, 0.0, %v576
  %v588 = vsel %vm287, 0.0, %v575
  %v589 = vsel %vm288, 0.0, %v574
  %v598 = vunpack.c.l.b16 %v383
  %v599 = vunpack.c.l.b16 %v384
  %v600 = vunpack.c.l.b16 %v385
  %v601 = vunpack.c.l.b16 %v386
  %v602 = vunpack.c.l.b16 %v387
  %v603 = vunpack.c.l.b16 %v388
  %v604 = vunpack.c.l.b16 %v389
  %v605 = vunpack.c.l.b16 %v390
  %v606 = vpack.c.b16 %v599, %v598
  %v607 = vpack.c.b16 %v601, %v600
  %v608 = vpack.c.b16 %v603, %v602
  %v609 = vpack.c.b16 %v605, %v604
  %614 = vmatprep.subr.bf16.mxu0 0
  %615 = vmatpush1.bf16.msra.mxu0 %v606
  %616 = vmatprep.subr.bf16.mxu0 0
  %617 = vmatpush1.bf16.msra.mxu0 %v607
  %618 = vmatprep.subr.bf16.mxu0 0
  %619 = vmatpush1.bf16.msra.mxu0 %v608
  %620 = vmatprep.subr.bf16.mxu0 0
  %621 = vmatpush1.bf16.msra.mxu0 %v609
  %622 = vmatprep.subr.bf16.mxu0 0
  %623 = vmatpush1.bf16.msra.mxu0 0
  %624 = vmatprep.subr.bf16.mxu0 0
  %625 = vmatpush1.bf16.msra.mxu0 0
  %626 = vmatprep.subr.bf16.mxu0 0
  %627 = vmatpush1.bf16.msra.mxu0 0
  %628 = vmatprep.subr.bf16.mxu0 0
  %629 = vmatpush1.bf16.msra.mxu0 0
  %630 = vmatprep.subr.bf16.mxu0 0
  %631 = vmatpush1.bf16.msra.mxu0 0
  %632 = vmatprep.subr.bf16.mxu0 0
  %633 = vmatpush1.bf16.msra.mxu0 0
  %634 = vmatprep.subr.bf16.mxu0 0
  %635 = vmatpush1.bf16.msra.mxu0 0
  %636 = vmatprep.subr.bf16.mxu0 0
  %637 = vmatpush1.bf16.msra.mxu0 0
  %638 = vmatprep.subr.bf16.mxu0 0
  %639 = vmatpush1.bf16.msra.mxu0 0
  %640 = vmatprep.subr.bf16.mxu0 0
  %641 = vmatpush1.bf16.msra.mxu0 0
  %642 = vmatprep.subr.bf16.mxu0 0
  %643 = vmatpush1.bf16.msra.mxu0 0
  %644 = vmatprep.subr.bf16.mxu0 0
  %645 = vmatpush1.bf16.msra.mxu0 0
  %646 = vmatprep.mubr.bf16.mxu0 0
  %647 = vmatmul.mubr.bf16.gmra.mrb[0].mxu0 %v434
  %v648 = vpop.f32.mrb[0].mxu0
  %v649 = vadd.f32 %v586, %v648
  %v650 = vpop.f32.mrb[0].mxu0
  %v651 = vpop.f32.mrb[0].mxu0
  %v652 = vadd.f32 %v587, %v651
  %v653 = vpop.f32.mrb[0].mxu0
  %654 = vmatprep.mubr.bf16.mxu0 0
  %655 = vmatmul.mubr.bf16.gmra.mrb[0].mxu0 %v437
  %v656 = vpop.f32.mrb[0].mxu0
  %v657 = vadd.f32 %v588, %v656
  %v658 = vpop.f32.mrb[0].mxu0
  %v659 = vpop.f32.mrb[0].mxu0
  %v660 = vadd.f32 %v589, %v659
  %v661 = vpop.f32.mrb[0].mxu0
  %662 = vdwg.mxu0
  %v663 = vsel %vm366, 0.0, %v584
  %v664 = vsel %vm367, 0.0, %v583
  %v665 = vsel %vm368, 0.0, %v582
  %v666 = vsel %vm369, 0.0, %v585
  %v667 = vadd.f32 %v649, %v663
  %v668 = vadd.f32 %v652, %v664
  %v669 = vadd.f32 %v657, %v665
  %v670 = vadd.f32 %v660, %v666
  %v671 = vadd.f32 %v374, %v667
  %v672 = vadd.f32 %v375, %v668
  %v673 = vadd.f32 %v376, %v669
  %v674 = vadd.f32 %v377, %v670
  %v675 = vpack.c.bf16 %v672, %v671
  %v676 = vpack.c.bf16 %v674, %v673
  %v679 = vunpack.c.l.b16 %v675
  %v680 = vunpack.c.h.b16 %v675
  %v681 = vunpack.c.l.b16 %v676
  %v682 = vunpack.c.h.b16 %v676
  %v683 = vpack.c.b16 %v679, %v679
  %v684 = vpack.c.b16 %v680, %v680
  %v685 = vpack.c.b16 %v681, %v681
  %v686 = vpack.c.b16 %v682, %v682
  %691 = vst [vmem:[%s4] sm:$0xf] %v683
  %692 = vst [vmem:[%s4 + $0x4] sm:$0xf] %v684
  %693 = vst [vmem:[%s4 + $0x8] sm:$0xf] %v685
  %694 = vst [vmem:[%s4 + $0xc] sm:$0xf] %v686
  %v695 = vadd.f32 %v671, %v672
  %v696 = vadd.f32 %v695, %v673
  %v697 = vadd.f32 %v696, %v674
  %v698 = vrot.slane %v697, 4
  %v699 = vadd.f32 %v697, %v698
  %v700 = vrot.slane %v699, 2
  %v701 = vadd.f32 %v699, %v700
  %v702 = vrot.slane %v701, 1
  %v703 = vadd.f32 %v701, %v702
  %704 = vst [vmem:[%s5] sm:$0x1] %v703
  %v705 = vmul.f32 %v671, %v671
  %v706 = vmul.f32 %v672, %v672
  %v707 = vmul.f32 %v673, %v673
  %v708 = vmul.f32 %v674, %v674
  %v709 = vadd.f32 %v705, %v706
  %v710 = vadd.f32 %v709, %v707
  %v711 = vadd.f32 %v710, %v708
  %v712 = vrot.slane %v711, 4
  %v713 = vadd.f32 %v711, %v712
  %v714 = vrot.slane %v713, 2
  %v715 = vadd.f32 %v713, %v714
  %v716 = vrot.slane %v715, 1
  %v717 = vadd.f32 %v715, %v716
  %718 = vst [vmem:[%s6] sm:$0x1] %v717
  // Predicated region
  $region18: #{upconv_forward.4} parent=0 // pred_check
    _
  $region19: #{upconv_forward.4} parent=0 // pred_check_branch
    %720 = sbr.rel (0) target = $region21
  $region20: #{upconv_forward.4} parent=0 // pred_region
    _
  $region21: #{upconv_forward.4} parent=0 // pred_fallthru
    _
  // Predicated region
  $region22: #{upconv_forward.4} parent=0 // pred_check
    _
  $region23: #{upconv_forward.4} parent=0 // pred_check_branch
    %722 = sbr.rel (0) target = $region25
  $region24: #{upconv_forward.4} parent=0 // pred_region
    _
  $region25: #{upconv_forward.4} parent=0 // pred_fallthru
    _
  // Predicated region
  $region26: #{upconv_forward.4} parent=0 // pred_check
    _
  $region27: #{upconv_forward.4} parent=0 // pred_check_branch
    %724 = sbr.rel (0) target = $region29
  $region28: #{upconv_forward.4} parent=0 // pred_region
    _
  $region29: #{upconv_forward.4} parent=0 // pred_fallthru
    _
  // Predicated region
  $region30: #{upconv_forward.4} parent=0 // pred_check
    _
  $region31: #{upconv_forward.4} parent=0 // pred_check_branch
    %726 = sbr.rel (0) target = $region33
  $region32: #{upconv_forward.4} parent=0 // pred_region
    _
  $region33: #{upconv_forward.4} parent=0 // pred_fallthru
    _
  // Predicated region
  $region34: #{upconv_forward.4} parent=0 // pred_check
    _
  $region35: #{upconv_forward.4} parent=0 // pred_check_branch
    %728 = sbr.rel (0) target = $region37
  $region36: #{upconv_forward.4} parent=0 // pred_region
    _
  $region37: #{upconv_forward.4} parent=0 // pred_fallthru
    _
  // Predicated region
  $region38: #{upconv_forward.4} parent=0 // pred_check
    _
  $region39: #{upconv_forward.4} parent=0 // pred_check_branch
    %730 = sbr.rel (0) target = $region41
  $region40: #{upconv_forward.4} parent=0 // pred_region
    _
  $region41: #{upconv_forward.4} parent=0 // pred_fallthru
    _

// kernel: upconv_forward.5
$region0: #{upconv_forward.5}
  #allocation0 [shape = 'u32[]', space=smem, size = 0x4, offset = 0x4, fixed_abs, tag = 'smem constant byte address 0x4 - core index']
  #allocation1 [shape = 'u32[144,128]{1,0:T(1,128)}', space=vmem, size = 0x12000, scoped, tag = 'internal scratch']
  %s0 = inlined_call_operand.vmem [shape: bf16[32,128], index: 0, kind: input, shape index: {}]
  %s1 = inlined_call_operand.vmem [shape: f32[1,128], index: 1, kind: input, shape index: {}]
  %s2 = inlined_call_operand.vmem [shape: f32[1,128], index: 2, kind: input, shape index: {}]
  %s3 = inlined_call_operand.vmem [shape: bf16[3,128,128], index: 3, kind: input, shape index: {}]
  %s4 = inlined_call_operand.vmem [shape: bf16[32,128], index: 4, kind: output, shape index: {0}]
  %s5 = inlined_call_operand.vmem [shape: f32[1,1,128], index: 5, kind: output, shape index: {1}]
  %s6 = inlined_call_operand.vmem [shape: f32[1,1,128], index: 6, kind: output, shape index: {2}]
  %7 = xla_tuple %s4, %s5, %s6
  %s8 = sld [smem:[#allocation0]]
  $region42: #{upconv_forward.5} parent=0
    _
  %s10 = ssub.s32 1, %s8
  %s11 = scalar_select 0, %s10, %s8
  // Predicated region
  $region2: #{upconv_forward.5} parent=0 // pred_check
    _
  $region3: #{upconv_forward.5} parent=0 // pred_check_branch
    %13 = sbr.rel (0) target = $region5
  $region4: #{upconv_forward.5} parent=0 // pred_region
    _
  $region5: #{upconv_forward.5} parent=0 // pred_fallthru
    _
  // Predicated region
  $region6: #{upconv_forward.5} parent=0 // pred_check
    _
  $region7: #{upconv_forward.5} parent=0 // pred_check_branch
    %15 = sbr.rel (0) target = $region9
  $region8: #{upconv_forward.5} parent=0 // pred_region
    _
  $region9: #{upconv_forward.5} parent=0 // pred_fallthru
    _
  // Predicated region
  $region10: #{upconv_forward.5} parent=0 // pred_check
    _
  $region11: #{upconv_forward.5} parent=0 // pred_check_branch
    %17 = sbr.rel (0) target = $region13
  $region12: #{upconv_forward.5} parent=0 // pred_region
    _
  $region13: #{upconv_forward.5} parent=0 // pred_fallthru
    _
  // Predicated region
  $region14: #{upconv_forward.5} parent=0 // pred_check
    _
  $region15: #{upconv_forward.5} parent=0 // pred_check_branch
    %19 = sbr.rel (0) target = $region17
  $region16: #{upconv_forward.5} parent=0 // pred_region
    _
  $region17: #{upconv_forward.5} parent=0 // pred_fallthru
    _
  %v21 = vld [vmem:[%s0] sm:$0xf]
  %v22 = vld [vmem:[%s0 + $0x4] sm:$0xf]
  %v23 = vld [vmem:[%s0 + $0x8] sm:$0xf]
  %v24 = vld [vmem:[%s0 + $0xc] sm:$0xf]
  %v25 = vunpack.c.l.bf16 %v21
  %v26 = vunpack.c.l.bf16 %v22
  %v27 = vunpack.c.l.bf16 %v23
  %v28 = vunpack.c.l.bf16 %v24
  %v29 = vld [vmem:[%s1] sm:$0x1]
  %v31 = vlaneseq
  %v32 = vshrl.u32 %v31, 7
  %v33 = vsub.s32 0, %v32
  %v34 = vrot.slane %v29, %v33
  %v36 = vmul.f32 %v25, %v34
  %v37 = vmul.f32 %v26, %v34
  %v38 = vmul.f32 %v27, %v34
  %v39 = vmul.f32 %v28, %v34
  %v40 = vld [vmem:[%s2] sm:$0x1]
  %v42 = vlaneseq
  %v43 = vshrl.u32 %v42, 7
  %v44 = vsub.s32 0, %v43
  %v45 = vrot.slane %v40, %v44
  %v47 = vadd.f32 %v36, %v45
  %v48 = vadd.f32 %v37, %v45
  %v49 = vadd.f32 %v38, %v45
  %v50 = vadd.f32 %v39, %v45
  %v51 = vmax.f32 %v47, 0.0
  %v52 = vmax.f32 %v48, 0.0
  %v53 = vmax.f32 %v49, 0.0
  %v54 = vmax.f32 %v50, 0.0
  %v55 = vpack.c.bf16 %v52, %v51
  %v56 = vpack.c.bf16 %v54, %v53
  %s57 = scalar_lea.vmem %s3, 64
  %v58 = vld [vmem:[%s57] sm:$0xf]
  %v59 = vld [vmem:[%s57 + $0x4] sm:$0xf]
  %v60 = vld [vmem:[%s57 + $0x8] sm:$0xf]
  %v61 = vld [vmem:[%s57 + $0xc] sm:$0xf]
  %v62 = vld [vmem:[%s57 + $0x10] sm:$0xf]
  %v63 = vld [vmem:[%s57 + $0x14] sm:$0xf]
  %v64 = vld [vmem:[%s57 + $0x18] sm:$0xf]
  %v65 = vld [vmem:[%s57 + $0x1c] sm:$0xf]
  %v66 = vld [vmem:[%s57 + $0x20] sm:$0xf]
  %v67 = vld [vmem:[%s57 + $0x24] sm:$0xf]
  %v68 = vld [vmem:[%s57 + $0x28] sm:$0xf]
  %v69 = vld [vmem:[%s57 + $0x2c] sm:$0xf]
  %v70 = vld [vmem:[%s57 + $0x30] sm:$0xf]
  %v71 = vld [vmem:[%s57 + $0x34] sm:$0xf]
  %v72 = vld [vmem:[%s57 + $0x38] sm:$0xf]
  %v73 = vld [vmem:[%s57 + $0x3c] sm:$0xf]
  %v74 = vld [vmem:[%s3] sm:$0xf]
  %v75 = vld [vmem:[%s3 + $0x4] sm:$0xf]
  %v76 = vld [vmem:[%s3 + $0x8] sm:$0xf]
  %v77 = vld [vmem:[%s3 + $0xc] sm:$0xf]
  %v78 = vld [vmem:[%s3 + $0x10] sm:$0xf]
  %v79 = vld [vmem:[%s3 + $0x14] sm:$0xf]
  %v80 = vld [vmem:[%s3 + $0x18] sm:$0xf]
  %v81 = vld [vmem:[%s3 + $0x1c] sm:$0xf]
  %v82 = vld [vmem:[%s3 + $0x20] sm:$0xf]
  %v83 = vld [vmem:[%s3 + $0x24] sm:$0xf]
  %v84 = vld [vmem:[%s3 + $0x28] sm:$0xf]
  %v85 = vld [vmem:[%s3 + $0x2c] sm:$0xf]
  %v86 = vld [vmem:[%s3 + $0x30] sm:$0xf]
  %v87 = vld [vmem:[%s3 + $0x34] sm:$0xf]
  %v88 = vld [vmem:[%s3 + $0x38] sm:$0xf]
  %v89 = vld [vmem:[%s3 + $0x3c] sm:$0xf]
  %v106 = vunpack.c.l.b16 %v74
  %v107 = vunpack.c.l.b16 %v75
  %v108 = vunpack.c.l.b16 %v76
  %v109 = vunpack.c.l.b16 %v77
  %v110 = vunpack.c.l.b16 %v78
  %v111 = vunpack.c.l.b16 %v79
  %v112 = vunpack.c.l.b16 %v80
  %v113 = vunpack.c.l.b16 %v81
  %v114 = vunpack.c.l.b16 %v82
  %v115 = vunpack.c.l.b16 %v83
  %v116 = vunpack.c.l.b16 %v84
  %v117 = vunpack.c.l.b16 %v85
  %v118 = vunpack.c.l.b16 %v86
  %v119 = vunpack.c.l.b16 %v87
  %v120 = vunpack.c.l.b16 %v88
  %v121 = vunpack.c.l.b16 %v89
  %v122 = vpack.c.b16 %v107, %v106
  %v123 = vpack.c.b16 %v109, %v108
  %v124 = vpack.c.b16 %v111, %v110
  %v125 = vpack.c.b16 %v113, %v112
  %v126 = vpack.c.b16 %v115, %v114
  %v127 = vpack.c.b16 %v117, %v116
  %v128 = vpack.c.b16 %v119, %v118
  %v129 = vpack.c.b16 %v121, %v120
  %138 = vmatprep.subr.bf16.mxu0 0
  %139 = vmatpush1.bf16.msra.mxu0 %v122
  %140 = vmatprep.subr.bf16.mxu0 0
  %141 = vmatpush1.bf16.msra.mxu0 %v123
  %142 = vmatprep.subr.bf16.mxu0 0
  %143 = vmatpush1.bf16.msra.mxu0 %v124
  %144 = vmatprep.subr.bf16.mxu0 0
  %145 = vmatpush1.bf16.msra.mxu0 %v125
  %146 = vmatprep.subr.bf16.mxu0 0
  %147 = vmatpush1.bf16.msra.mxu0 %v126
  %148 = vmatprep.subr.bf16.mxu0 0
  %149 = vmatpush1.bf16.msra.mxu0 %v127
  %150 = vmatprep.subr.bf16.mxu0 0
  %151 = vmatpush1.bf16.msra.mxu0 %v128
  %152 = vmatprep.subr.bf16.mxu0 0
  %153 = vmatpush1.bf16.msra.mxu0 %v129
  %154 = vmatprep.subr.bf16.mxu0 0
  %155 = vmatpush1.bf16.msra.mxu0 0
  %156 = vmatprep.subr.bf16.mxu0 0
  %157 = vmatpush1.bf16.msra.mxu0 0
  %158 = vmatprep.subr.bf16.mxu0 0
  %159 = vmatpush1.bf16.msra.mxu0 0
  %160 = vmatprep.subr.bf16.mxu0 0
  %161 = vmatpush1.bf16.msra.mxu0 0
  %162 = vmatprep.subr.bf16.mxu0 0
  %163 = vmatpush1.bf16.msra.mxu0 0
  %164 = vmatprep.subr.bf16.mxu0 0
  %165 = vmatpush1.bf16.msra.mxu0 0
  %166 = vmatprep.subr.bf16.mxu0 0
  %167 = vmatpush1.bf16.msra.mxu0 0
  %168 = vmatprep.subr.bf16.mxu0 0
  %169 = vmatpush1.bf16.msra.mxu0 0
  %170 = vmatprep.mubr.bf16.mxu0 0
  %171 = vmatmul.mubr.bf16.gmra.mrb[0].mxu0 %v55
  %v172 = vpop.f32.mrb[0].mxu0
  %v173 = vadd.f32 0.0, %v172
  %v174 = vpop.f32.mrb[0].mxu0
  %v175 = vpop.f32.mrb[0].mxu0
  %v176 = vadd.f32 0.0, %v175
  %v177 = vpop.f32.mrb[0].mxu0
  %178 = vmatprep.mubr.bf16.mxu0 0
  %179 = vmatmul.mubr.bf16.gmra.mrb[0].mxu0 %v56
  %v180 = vpop.f32.mrb[0].mxu0
  %v181 = vadd.f32 0.0, %v180
  %v182 = vpop.f32.mrb[0].mxu0
  %v183 = vpop.f32.mrb[0].mxu0
  %v184 = vadd.f32 0.0, %v183
  %v185 = vpop.f32.mrb[0].mxu0
  %186 = vdwg.mxu0
  %s187 = scalar_lea.vmem %s3, 128
  %v188 = vld [vmem:[%s187] sm:$0xf]
  %v189 = vld [vmem:[%s187 + $0x4] sm:$0xf]
  %v190 = vld [vmem:[%s187 + $0x8] sm:$0xf]
  %v191 = vld [vmem:[%s187 + $0xc] sm:$0xf]
  %v192 = vld [vmem:[%s187 + $0x10] sm:$0xf]
  %v193 = vld [vmem:[%s187 + $0x14] sm:$0xf]
  %v194 = vld [vmem:[%s187 + $0x18] sm:$0xf]
  %v195 = vld [vmem:[%s187 + $0x1c] sm:$0xf]
  %v196 = vld [vmem:[%s187 + $0x20] sm:$0xf]
  %v197 = vld [vmem:[%s187 + $0x24] sm:$0xf]
  %v198 = vld [vmem:[%s187 + $0x28] sm:$0xf]
  %v199 = vld [vmem:[%s187 + $0x2c] sm:$0xf]
  %v200 = vld [vmem:[%s187 + $0x30] sm:$0xf]
  %v201 = vld [vmem:[%s187 + $0x34] sm:$0xf]
  %v202 = vld [vmem:[%s187 + $0x38] sm:$0xf]
  %v203 = vld [vmem:[%s187 + $0x3c] sm:$0xf]
  %v220 = vunpack.c.l.b16 %v188
  %v221 = vunpack.c.l.b16 %v189
  %v222 = vunpack.c.l.b16 %v190
  %v223 = vunpack.c.l.b16 %v191
  %v224 = vunpack.c.l.b16 %v192
  %v225 = vunpack.c.l.b16 %v193
  %v226 = vunpack.c.l.b16 %v194
  %v227 = vunpack.c.l.b16 %v195
  %v228 = vunpack.c.l.b16 %v196
  %v229 = vunpack.c.l.b16 %v197
  %v230 = vunpack.c.l.b16 %v198
  %v231 = vunpack.c.l.b16 %v199
  %v232 = vunpack.c.l.b16 %v200
  %v233 = vunpack.c.l.b16 %v201
  %v234 = vunpack.c.l.b16 %v202
  %v235 = vunpack.c.l.b16 %v203
  %v236 = vpack.c.b16 %v221, %v220
  %v237 = vpack.c.b16 %v223, %v222
  %v238 = vpack.c.b16 %v225, %v224
  %v239 = vpack.c.b16 %v227, %v226
  %v240 = vpack.c.b16 %v229, %v228
  %v241 = vpack.c.b16 %v231, %v230
  %v242 = vpack.c.b16 %v233, %v232
  %v243 = vpack.c.b16 %v235, %v234
  %252 = vmatprep.subr.bf16.mxu0 0
  %253 = vmatpush1.bf16.msra.mxu0 %v236
  %254 = vmatprep.subr.bf16.mxu0 0
  %255 = vmatpush1.bf16.msra.mxu0 %v237
  %256 = vmatprep.subr.bf16.mxu0 0
  %257 = vmatpush1.bf16.msra.mxu0 %v238
  %258 = vmatprep.subr.bf16.mxu0 0
  %259 = vmatpush1.bf16.msra.mxu0 %v239
  %260 = vmatprep.subr.bf16.mxu0 0
  %261 = vmatpush1.bf16.msra.mxu0 %v240
  %262 = vmatprep.subr.bf16.mxu0 0
  %263 = vmatpush1.bf16.msra.mxu0 %v241
  %264 = vmatprep.subr.bf16.mxu0 0
  %265 = vmatpush1.bf16.msra.mxu0 %v242
  %266 = vmatprep.subr.bf16.mxu0 0
  %267 = vmatpush1.bf16.msra.mxu0 %v243
  %268 = vmatprep.subr.bf16.mxu0 0
  %269 = vmatpush1.bf16.msra.mxu0 0
  %270 = vmatprep.subr.bf16.mxu0 0
  %271 = vmatpush1.bf16.msra.mxu0 0
  %272 = vmatprep.subr.bf16.mxu0 0
  %273 = vmatpush1.bf16.msra.mxu0 0
  %274 = vmatprep.subr.bf16.mxu0 0
  %275 = vmatpush1.bf16.msra.mxu0 0
  %276 = vmatprep.subr.bf16.mxu0 0
  %277 = vmatpush1.bf16.msra.mxu0 0
  %278 = vmatprep.subr.bf16.mxu0 0
  %279 = vmatpush1.bf16.msra.mxu0 0
  %280 = vmatprep.subr.bf16.mxu0 0
  %281 = vmatpush1.bf16.msra.mxu0 0
  %282 = vmatprep.subr.bf16.mxu0 0
  %283 = vmatpush1.bf16.msra.mxu0 0
  %284 = vmatprep.mubr.bf16.mxu0 0
  %285 = vmatmul.mubr.bf16.gmra.mrb[0].mxu0 %v55
  %v286 = vpop.f32.mrb[0].mxu0
  %v287 = vadd.f32 0.0, %v286
  %v288 = vpop.f32.mrb[0].mxu0
  %v289 = vpop.f32.mrb[0].mxu0
  %v290 = vadd.f32 0.0, %v289
  %v291 = vpop.f32.mrb[0].mxu0
  %292 = vmatprep.mubr.bf16.mxu0 0
  %293 = vmatmul.mubr.bf16.gmra.mrb[0].mxu0 %v56
  %v294 = vpop.f32.mrb[0].mxu0
  %v295 = vadd.f32 0.0, %v294
  %v296 = vpop.f32.mrb[0].mxu0
  %v297 = vpop.f32.mrb[0].mxu0
  %v298 = vadd.f32 0.0, %v297
  %v299 = vpop.f32.mrb[0].mxu0
  %300 = vdwg.mxu0
  %v301 = vlaneseq
  %v302 = vshrl.u32 %v301, 7
  %v303 = vadd.s32 %v302, 8
  %v304 = vadd.s32 %v302, 16
  %v305 = vadd.s32 %v302, 24
  %vm306 = vcmp.lt.s32.totalorder %v302, 0
  %v307 = vsub.s32 0, %v302
  %v308 = vsel %vm306, %v307, %v302
  %v309 = vshrl.u32 %v308, 4
  %v310 = vand.u32 %v308, 15
  %v311 = vsub.s32 0, %v310
  %v312 = vsel %vm306, %v311, %v310
  %vm313 = vcmp.lt.s32.totalorder %v303, 0
  %v314 = vsub.s32 0, %v303
  %v315 = vsel %vm313, %v314, %v303
  %v316 = vshrl.u32 %v315, 4
  %v317 = vand.u32 %v315, 15
  %v318 = vsub.s32 0, %v317
  %v319 = vsel %vm313, %v318, %v317
  %vm320 = vcmp.lt.s32.totalorder %v304, 0
  %v321 = vsub.s32 0, %v304
  %v322 = vsel %vm320, %v321, %v304
  %v323 = vshrl.u32 %v322, 4
  %v324 = vand.u32 %v322, 15
  %v325 = vsub.s32 0, %v324
  %v326 = vsel %vm320, %v325, %v324
  %vm327 = vcmp.lt.s32.totalorder %v305, 0
  %v328 = vsub.s32 0, %v305
  %v329 = vsel %vm327, %v328, %v305
  %v330 = vshrl.u32 %v329, 4
  %v331 = vand.u32 %v329, 15
  %v332 = vsub.s32 0, %v331
  %v333 = vsel %vm327, %v332, %v331
  %vm334 = vcmp.ne.s32.totalorder %v312, 0
  %vm335 = vcmp.ne.s32.totalorder %v319, 0
  %vm336 = vcmp.ne.s32.totalorder %v326, 0
  %vm337 = vcmp.ne.s32.totalorder %v333, 0
  %vm338 = vcmp.lt.s32.totalorder %v312, 0
  %vm339 = vcmp.lt.s32.totalorder %v319, 0
  %vm340 = vcmp.lt.s32.totalorder %v326, 0
  %vm341 = vcmp.lt.s32.totalorder %v333, 0
  %vm342 = vmand %vm338, %vm334
  %vm343 = vmand %vm339, %vm335
  %vm344 = vmand %vm340, %vm336
  %vm345 = vmand %vm341, %vm337
  %v346 = vadd.s32 %v312, 16
  %v347 = vadd.s32 %v319, 16
  %v348 = vadd.s32 %v326, 16
  %v349 = vadd.s32 %v333, 16
  %v350 = vsel %vm342, %v346, %v312
  %v351 = vsel %vm343, %v347, %v319
  %v352 = vsel %vm344, %v348, %v326
  %v353 = vsel %vm345, %v349, %v333
  %v354 = vrot.slane %v173, 7
  %v355 = vrot.slane %v176, 7
  %v356 = vrot.slane %v181, 7
  %v357 = vrot.slane %v184, 7
  %vm358 = vcmp.lt.s32.totalorder %v302, 1
  %v359 = vsel %vm358, %v356, %v357
  %v360 = vsel %vm358, %v355, %v356
  %v361 = vsel %vm358, %v354, %v355
  %v362 = vsel %vm358, %v357, %v354
  %v363 = vrot.slane %v287, 1
  %v364 = vrot.slane %v290, 1
  %v365 = vrot.slane %v295, 1
  %v366 = vrot.slane %v298, 1
  %vm367 = vcmp.lt.s32.totalorder %v302, 7
  %v368 = vsel %vm367, %v365, %v366
  %v369 = vsel %vm367, %v364, %v365
  %v370 = vsel %vm367, %v363, %v364
  %v371 = vsel %vm367, %v366, %v363
  %vm372 = vcmp.eq.s32.totalorder %v350, 0
  %vm373 = vcmp.eq.s32.totalorder %v351, 0
  %vm374 = vcmp.eq.s32.totalorder %v352, 0
  %vm375 = vcmp.eq.s32.totalorder %v353, 0
  %v376 = vsel %vm372, 0.0, %v362
  %v377 = vsel %vm373, 0.0, %v361
  %v378 = vsel %vm374, 0.0, %v360
  %v379 = vsel %vm375, 0.0, %v359
  %v396 = vunpack.c.l.b16 %v58
  %v397 = vunpack.c.l.b16 %v59
  %v398 = vunpack.c.l.b16 %v60
  %v399 = vunpack.c.l.b16 %v61
  %v400 = vunpack.c.l.b16 %v62
  %v401 = vunpack.c.l.b16 %v63
  %v402 = vunpack.c.l.b16 %v64
  %v403 = vunpack.c.l.b16 %v65
  %v404 = vunpack.c.l.b16 %v66
  %v405 = vunpack.c.l.b16 %v67
  %v406 = vunpack.c.l.b16 %v68
  %v407 = vunpack.c.l.b16 %v69
  %v408 = vunpack.c.l.b16 %v70
  %v409 = vunpack.c.l.b16 %v71
  %v410 = vunpack.c.l.b16 %v72
  %v411 = vunpack.c.l.b16 %v73
  %v412 = vpack.c.b16 %v397, %v396
  %v413 = vpack.c.b16 %v399, %v398
  %v414 = vpack.c.b16 %v401, %v400
  %v415 = vpack.c.b16 %v403, %v402
  %v416 = vpack.c.b16 %v405, %v404
  %v417 = vpack.c.b16 %v407, %v406
  %v418 = vpack.c.b16 %v409, %v408
  %v419 = vpack.c.b16 %v411, %v410
  %428 = vmatprep.subr.bf16.mxu0 0
  %429 = vmatpush1.bf16.msra.mxu0 %v412
  %430 = vmatprep.subr.bf16.mxu0 0
  %431 = vmatpush1.bf16.msra.mxu0 %v413
  %432 = vmatprep.subr.bf16.mxu0 0
  %433 = vmatpush1.bf16.msra.mxu0 %v414
  %434 = vmatprep.subr.bf16.mxu0 0
  %435 = vmatpush1.bf16.msra.mxu0 %v415
  %436 = vmatprep.subr.bf16.mxu0 0
  %437 = vmatpush1.bf16.msra.mxu0 %v416
  %438 = vmatprep.subr.bf16.mxu0 0
  %439 = vmatpush1.bf16.msra.mxu0 %v417
  %440 = vmatprep.subr.bf16.mxu0 0
  %441 = vmatpush1.bf16.msra.mxu0 %v418
  %442 = vmatprep.subr.bf16.mxu0 0
  %443 = vmatpush1.bf16.msra.mxu0 %v419
  %444 = vmatprep.subr.bf16.mxu0 0
  %445 = vmatpush1.bf16.msra.mxu0 0
  %446 = vmatprep.subr.bf16.mxu0 0
  %447 = vmatpush1.bf16.msra.mxu0 0
  %448 = vmatprep.subr.bf16.mxu0 0
  %449 = vmatpush1.bf16.msra.mxu0 0
  %450 = vmatprep.subr.bf16.mxu0 0
  %451 = vmatpush1.bf16.msra.mxu0 0
  %452 = vmatprep.subr.bf16.mxu0 0
  %453 = vmatpush1.bf16.msra.mxu0 0
  %454 = vmatprep.subr.bf16.mxu0 0
  %455 = vmatpush1.bf16.msra.mxu0 0
  %456 = vmatprep.subr.bf16.mxu0 0
  %457 = vmatpush1.bf16.msra.mxu0 0
  %458 = vmatprep.subr.bf16.mxu0 0
  %459 = vmatpush1.bf16.msra.mxu0 0
  %460 = vmatprep.mubr.bf16.mxu0 0
  %461 = vmatmul.mubr.bf16.gmra.mrb[0].mxu0 %v55
  %v462 = vpop.f32.mrb[0].mxu0
  %v463 = vadd.f32 %v376, %v462
  %v464 = vpop.f32.mrb[0].mxu0
  %v465 = vpop.f32.mrb[0].mxu0
  %v466 = vadd.f32 %v377, %v465
  %v467 = vpop.f32.mrb[0].mxu0
  %468 = vmatprep.mubr.bf16.mxu0 0
  %469 = vmatmul.mubr.bf16.gmra.mrb[0].mxu0 %v56
  %v470 = vpop.f32.mrb[0].mxu0
  %v471 = vadd.f32 %v378, %v470
  %v472 = vpop.f32.mrb[0].mxu0
  %v473 = vpop.f32.mrb[0].mxu0
  %v474 = vadd.f32 %v379, %v473
  %v475 = vpop.f32.mrb[0].mxu0
  %476 = vdwg.mxu0
  %vm477 = vcmp.eq.s32.totalorder %v350, 15
  %vm478 = vcmp.eq.s32.totalorder %v351, 15
  %vm479 = vcmp.eq.s32.totalorder %v352, 15
  %vm480 = vcmp.eq.s32.totalorder %v353, 15
  %v481 = vsel %vm477, 0.0, %v370
  %v482 = vsel %vm478, 0.0, %v369
  %v483 = vsel %vm479, 0.0, %v368
  %v484 = vsel %vm480, 0.0, %v371
  %v485 = vadd.f32 %v463, %v481
  %v486 = vadd.f32 %v466, %v482
  %v487 = vadd.f32 %v471, %v483
  %v488 = vadd.f32 %v474, %v484
  %v489 = vpack.c.bf16 %v486, %v485
  %v490 = vpack.c.bf16 %v488, %v487
  %v493 = vunpack.c.l.b16 %v489
  %v494 = vunpack.c.h.b16 %v489
  %v495 = vunpack.c.l.b16 %v490
  %v496 = vunpack.c.h.b16 %v490
  %v497 = vpack.c.b16 %v493, %v493
  %v498 = vpack.c.b16 %v494, %v494
  %v499 = vpack.c.b16 %v495, %v495
  %v500 = vpack.c.b16 %v496, %v496
  %505 = vst [vmem:[%s4] sm:$0xf] %v497
  %506 = vst [vmem:[%s4 + $0x4] sm:$0xf] %v498
  %507 = vst [vmem:[%s4 + $0x8] sm:$0xf] %v499
  %508 = vst [vmem:[%s4 + $0xc] sm:$0xf] %v500
  %v509 = vadd.f32 %v485, %v486
  %v510 = vadd.f32 %v509, %v487
  %v511 = vadd.f32 %v510, %v488
  %v512 = vrot.slane %v511, 4
  %v513 = vadd.f32 %v511, %v512
  %v514 = vrot.slane %v513, 2
  %v515 = vadd.f32 %v513, %v514
  %v516 = vrot.slane %v515, 1
  %v517 = vadd.f32 %v515, %v516
  %518 = vst [vmem:[%s5] sm:$0x1] %v517
  %v519 = vmul.f32 %v485, %v485
  %v520 = vmul.f32 %v486, %v486
  %v521 = vmul.f32 %v487, %v487
  %v522 = vmul.f32 %v488, %v488
  %v523 = vadd.f32 %v519, %v520
  %v524 = vadd.f32 %v523, %v521
  %v525 = vadd.f32 %v524, %v522
  %v526 = vrot.slane %v525, 4
  %v527 = vadd.f32 %v525, %v526
  %v528 = vrot.slane %v527, 2
  %v529 = vadd.f32 %v527, %v528
  %v530 = vrot.slane %v529, 1
  %v531 = vadd.f32 %v529, %v530
  %532 = vst [vmem:[%s6] sm:$0x1] %v531
  // Predicated region
  $region18: #{upconv_forward.5} parent=0 // pred_check
    _
  $region19: #{upconv_forward.5} parent=0 // pred_check_branch
    %534 = sbr.rel (0) target = $region21
  $region20: #{upconv_forward.5} parent=0 // pred_region
    _
  $region21: #{upconv_forward.5} parent=0 // pred_fallthru
    _
  // Predicated region
  $region22: #{upconv_forward.5} parent=0 // pred_check
    _
  $region23: #{upconv_forward.5} parent=0 // pred_check_branch
    %536 = sbr.rel (0) target = $region25
  $region24: #{upconv_forward.5} parent=0 // pred_region
    _
  $region25: #{upconv_forward.5} parent=0 // pred_fallthru
    _
  // Predicated region
  $region26: #{upconv_forward.5} parent=0 // pred_check
    _
  $region27: #{upconv_forward.5} parent=0 // pred_check_branch
    %538 = sbr.rel (0) target = $region29
  $region28: #{upconv_forward.5} parent=0 // pred_region
    _
  $region29: #{upconv_forward.5} parent=0 // pred_fallthru
    _
  // Predicated region
  $region30: #{upconv_forward.5} parent=0 // pred_check
    _
  $region31: #{upconv_forward.5} parent=0 // pred_check_branch
    %540 = sbr.rel (0) target = $region33
  $region32: #{upconv_forward.5} parent=0 // pred_region
    _
  $region33: #{upconv_forward.5} parent=0 // pred_fallthru
    _
  // Predicated region
  $region34: #{upconv_forward.5} parent=0 // pred_check
    _
  $region35: #{upconv_forward.5} parent=0 // pred_check_branch
    %542 = sbr.rel (0) target = $region37
  $region36: #{upconv_forward.5} parent=0 // pred_region
    _
  $region37: #{upconv_forward.5} parent=0 // pred_fallthru
    _
  // Predicated region
  $region38: #{upconv_forward.5} parent=0 // pred_check
    _
  $region39: #{upconv_forward.5} parent=0 // pred_check_branch
    %544 = sbr.rel (0) target = $region41
  $region40: #{upconv_forward.5} parent=0 // pred_region
    _
  $region41: #{upconv_forward.5} parent=0 // pred_fallthru
    _

</llo_original>
